<compile_context>
chip_gen: v7x
topology: tpu7x:2x2x1
jax: 0.10.0
libtpu: 0.0.40
codegen_flags: <defaults>
</compile_context>

<pallas_src>
import jax
import jax.numpy as jnp
from jax import lax
from jax.experimental import pallas as pl
from jax.experimental.pallas import tpu as pltpu


def _make_pooling_kernel(S, N):
    """Builds the kernel body. S = sequence length, N = (padded) #sentence slots."""

    def kernel(ids_ref, msk_ref, mask_blk_ref, wv_hbm, out_ref, gbuf, sems):
        # ids_ref      : SMEM (B, N) int32  (scalar prefetch) -- clamped token ids
        # msk_ref      : SMEM (B, N) int32  (scalar prefetch) -- 0/1 sentence mask
        # mask_blk_ref : VMEM (1, N, 1) block (wv dtype)      -- same mask, vector form
        # wv_hbm       : HBM ref, shape (B*S, H)  (memory_space=pl.ANY, manual DMA)
        # out_ref      : VMEM (1, N, H) output block
        # gbuf         : VMEM (2*N, H) double-buffered gather scratch
        # sems         : DMA semaphores (2*N,)
        b = pl.program_id(0)
        nb = pl.num_programs(0)
        slot = lax.rem(b, 2)          # current slot: rows [slot*N, slot*N + N)
        other = 1 - slot

        def issue(batch, slot_idx):
            # Issue the row-gather DMAs for `batch` into gbuf slot `slot_idx`,
            # skipping masked rows (HBM-bandwidth saving ~ masked fraction).
            # N is small and static -> Python unroll; for very large N use
            # lax.fori_loop(..., unroll=4..8) instead to bound code size.
            for n in range(N):
                @pl.when(msk_ref[batch, n] != 0)
                def _():
                    row = batch * S + ids_ref[batch, n]
                    pltpu.make_async_copy(
                        wv_hbm.at[pl.ds(row, 1)],                    # (1, H) HBM row
                        gbuf.at[pl.ds(slot_idx * N + n, 1)],         # (1, H) VMEM row
                        sems.at[slot_idx * N + n],
                    ).start()

        # Prime the pipeline: first step issues its own gathers.
        @pl.when(b == 0)
        def _():
            issue(b, slot)

        # Cross-step prefetch: issue batch b+1's gathers into the other slot
        # BEFORE waiting on the current slot, so they overlap this step's
        # wait / compute / output writeback.
        @pl.when(b + 1 < nb)
        def _():
            issue(b + 1, other)

        # Wait only on the DMAs that were actually issued for this batch
        # (same mask condition as at issue time).
        for n in range(N):
            @pl.when(msk_ref[b, n] != 0)
            def _():
                pltpu.make_async_copy(
                    wv_hbm.at[pl.ds(0, 1)],                          # shape/bytes only
                    gbuf.at[pl.ds(slot * N + n, 1)],
                    sems.at[slot * N + n],
                ).wait()

        # Masked select (NOT a multiply): masked rows were never DMA'd, so their
        # scratch contents may be stale/uninitialized; where() yields exact 0.
        row0 = pl.multiple_of(slot * N, 8)
        rows = gbuf[pl.ds(row0, N)]                                  # (N, H)
        m = mask_blk_ref[0]                                          # (N, 1)
        out_ref[0] = jnp.where(m != 0, rows, jnp.zeros_like(rows)).astype(out_ref.dtype)

    return kernel


def pooling_forward(word_vectors, sent_rep_token_ids, sent_rep_mask):
    """Pallas equivalent of Pooling(sent_rep_tokens=True, mean_tokens=False).forward."""
    B, S, H = word_vectors.shape
    N = sent_rep_token_ids.shape[1]
    dtype = word_vectors.dtype
    itemsize = int(jnp.dtype(dtype).itemsize)

    # Sublane-align N (8 for f32, 16 for bf16, 32 for int8) so scratch reads and
    # the (1, Np, H) output stores are unmasked full-vreg ops.
    sub = {1: 32, 2: 16, 4: 8}.get(itemsize, 8)
    Np = ((N + sub - 1) // sub) * sub
    pad = Np - N

    # Clamp ids so a malformed id can never turn into an out-of-bounds DMA.
    ids_i32 = jnp.clip(sent_rep_token_ids.astype(jnp.int32), 0, S - 1)
    msk_i32 = sent_rep_mask.astype(jnp.int32)
    mask_blk = sent_rep_mask.astype(dtype)[..., None]          # (B, N, 1)
    if pad:
        ids_i32 = jnp.pad(ids_i32, ((0, 0), (0, pad)))
        msk_i32 = jnp.pad(msk_i32, ((0, 0), (0, pad)))         # padded rows masked off
        mask_blk = jnp.pad(mask_blk, ((0, 0), (0, pad), (0, 0)))

    # Flat (B*S, H) view so the in-kernel gather is a single dynamic row slice.
    # TODO(synk): H not a multiple of 128 gives partially-masked lane stores and
    # sub-512B row DMAs; padding H would need a full (B,S,H) HBM copy, so it is
    # left to the caller.
    wv_flat = word_vectors.reshape(B * S, H)

    cost = pl.CostEstimate(
        flops=B * Np * H,                                   # mask select
        transcendentals=0,
        bytes_accessed=(2 * B * Np * H * itemsize           # gathered rows in + result out
                        + B * Np * 8                        # ids + mask (int32, SMEM)
                        + B * Np * itemsize),               # mask block
    )

    # VMEM budget: gather scratch (2*Np,H) + double-buffered out block (2*Np,H)
    # + tiny mask block.  Only raise the scoped limit when it actually matters
    # (v5e default is 16 MiB; v6e/v7x 32 MiB).
    vmem_need = (4 * Np * H + 2 * Np) * itemsize + 8 * Np
    vmem_limit = None
    if vmem_need > (12 << 20):
        vmem_limit = int(min(2 * vmem_need, 64 << 20))

    out = pl.pallas_call(
        _make_pooling_kernel(S, Np),
        out_shape=jax.ShapeDtypeStruct((B, Np, H), dtype),
        grid_spec=pltpu.PrefetchScalarGridSpec(
            num_scalar_prefetch=2,                           # ids, mask -> SMEM
            grid=(B,),
            in_specs=[
                pl.BlockSpec((1, Np, 1), lambda b, ids, msk: (b, 0, 0)),   # mask (VMEM)
                pl.BlockSpec(memory_space=pl.ANY),                         # word vectors (HBM)
            ],
            out_specs=pl.BlockSpec((1, Np, H), lambda b, ids, msk: (b, 0, 0)),
            scratch_shapes=[
                pltpu.VMEM((2 * Np, H), dtype),              # double-buffered gather
                pltpu.SemaphoreType.DMA((2 * Np,)),
            ],
        ),
        # "arbitrary": grid steps must run sequentially on one core because the
        # double-buffered gather state (in-flight DMAs for batch b+1) is
        # carried across steps.
        compiler_params=pltpu.CompilerParams(
            dimension_semantics=("arbitrary",),
            vmem_limit_bytes=vmem_limit,
        ),
        cost_estimate=cost,
    )(ids_i32, msk_i32, mask_blk, wv_flat)

    if pad:
        out = out[:, :N]
    output_mask = sent_rep_mask
    return out, output_mask


if __name__ == "__main__":
    key = jax.random.PRNGKey(0)
    # Small but layout-friendly demo shapes: H multiple of 128 (lane-dense
    # stores, 512 B f32 row DMAs), N = 8 (full f32 sublane group).
    B, S, H, N = 2, 16, 128, 8
    k1, k2, k3 = jax.random.split(key, 3)

    word_vectors = jax.random.normal(k1, (B, S, H), dtype=jnp.float32)
    sent_rep_token_ids = jax.random.randint(k2, (B, N), 0, S, dtype=jnp.int32)
    sent_rep_mask = jax.random.uniform(k3, (B, N)) > 0.2   # bool mask (ragged batches)

    out_vec, out_mask = pooling_forward(word_vectors, sent_rep_token_ids, sent_rep_mask)
    out_vec = jax.block_until_ready(out_vec)
    out_mask = jax.block_until_ready(out_mask)

    # Pure-JAX reference of the PyTorch semantics.
    ref_vec = (word_vectors[jnp.arange(B)[:, None], sent_rep_token_ids]
               * sent_rep_mask[:, :, None].astype(jnp.float32))
    assert out_vec.shape == (B, N, H) and out_mask.shape == (B, N)
    assert jnp.allclose(out_vec, ref_vec, atol=1e-5), "mismatch vs reference"
    assert jnp.array_equal(out_mask, sent_rep_mask)

    print("KERNEL_OK")
</pallas_src>

<mosaic_0001>
module attributes {stable_mosaic.version = 11 : i64} {
  func.func @kernel(%arg0: i32, %arg1: memref<2x8xi32, #tpu.memory_space<smem>>, %arg2: memref<2x8xi32, #tpu.memory_space<smem>>, %arg3: memref<1x8x1xf32, #tpu.memory_space<vmem>>, %arg4: memref<32x128xf32, #tpu.memory_space<any>>, %arg5: memref<1x8x128xf32, #tpu.memory_space<vmem>>, %arg6: memref<16x128xf32, #tpu.memory_space<vmem>>, %arg7: memref<16x!tpu.dma_semaphore, #tpu.memory_space<semaphore_mem>>) attributes {dimension_semantics = [#tpu.dimension_semantics<arbitrary>], iteration_bounds = array<i64: 2>, scalar_prefetch = 2 : i64, scratch_operands = 2 : i64, tpu.core_type = #tpu.core_type<tc>, window_params = [{transform_indices = @transform_0, window_bounds = array<i64: 1, 8, 1>}, {}, {transform_indices = @transform_2, window_bounds = array<i64: 1, 8, 128>}]} {
    %c2_i32 = arith.constant 2 : i32
    %0 = arith.remsi %arg0, %c2_i32 : i32
    %c1_i32 = arith.constant 1 : i32
    %1 = arith.subi %c1_i32, %0 : i32
    %c0_i32 = arith.constant 0 : i32
    %2 = arith.cmpi eq, %arg0, %c0_i32 : i32
    %3 = arith.extui %2 : i1 to i32
    %c0_i32_0 = arith.constant 0 : i32
    %4 = arith.cmpi ne, %3, %c0_i32_0 : i32
    scf.if %4 {
      %64 = arith.index_cast %arg0 : i32 to index
      %c0_28 = arith.constant 0 : index
      %65 = memref.load %arg2[%64, %c0_28] : memref<2x8xi32, #tpu.memory_space<smem>>
      %c0_i32_29 = arith.constant 0 : i32
      %66 = arith.cmpi ne, %65, %c0_i32_29 : i32
      %67 = arith.extui %66 : i1 to i32
      %c0_i32_30 = arith.constant 0 : i32
      %68 = arith.cmpi ne, %67, %c0_i32_30 : i32
      scf.if %68 {
        %c16_i32 = arith.constant 16 : i32
        %104 = arith.muli %arg0, %c16_i32 : i32
        %105 = arith.index_cast %arg0 : i32 to index
        %c0_52 = arith.constant 0 : index
        %106 = memref.load %arg1[%105, %c0_52] : memref<2x8xi32, #tpu.memory_space<smem>>
        %107 = arith.addi %104, %106 : i32
        %c8_i32_53 = arith.constant 8 : i32
        %108 = arith.muli %0, %c8_i32_53 : i32
        %c0_i32_54 = arith.constant 0 : i32
        %109 = arith.addi %108, %c0_i32_54 : i32
        %c8_i32_55 = arith.constant 8 : i32
        %110 = arith.muli %0, %c8_i32_55 : i32
        %c0_i32_56 = arith.constant 0 : i32
        %111 = arith.addi %110, %c0_i32_56 : i32
        %c0_i32_57 = arith.constant 0 : i32
        %112 = tpu.memref_slice %arg4[%107, %c0_i32_57] : memref<32x128xf32, #tpu.memory_space<any>> -> memref<1x128xf32, #tpu.memory_space<any>>
        %c0_i32_58 = arith.constant 0 : i32
        %113 = tpu.memref_slice %arg6[%109, %c0_i32_58] : memref<16x128xf32, #tpu.memory_space<vmem>> -> memref<1x128xf32, #tpu.memory_space<vmem>>
        %114 = tpu.memref_slice %arg7[%111] : memref<16x!tpu.dma_semaphore, #tpu.memory_space<semaphore_mem>> -> memref<1x!tpu.dma_semaphore, #tpu.memory_space<semaphore_mem>>
        %115 = tpu.memref_squeeze %114 : memref<1x!tpu.dma_semaphore, #tpu.memory_space<semaphore_mem>> -> memref<!tpu.dma_semaphore, #tpu.memory_space<semaphore_mem>>
        tpu.enqueue_dma source(%112 : memref<1x128xf32, #tpu.memory_space<any>>) target(%113 : memref<1x128xf32, #tpu.memory_space<vmem>>) target_semaphore(%115 : memref<!tpu.dma_semaphore, #tpu.memory_space<semaphore_mem>>)
      } else {
      }
      %69 = arith.index_cast %arg0 : i32 to index
      %c1_31 = arith.constant 1 : index
      %70 = memref.load %arg2[%69, %c1_31] : memref<2x8xi32, #tpu.memory_space<smem>>
      %c0_i32_32 = arith.constant 0 : i32
      %71 = arith.cmpi ne, %70, %c0_i32_32 : i32
      %72 = arith.extui %71 : i1 to i32
      %c0_i32_33 = arith.constant 0 : i32
      %73 = arith.cmpi ne, %72, %c0_i32_33 : i32
      scf.if %73 {
        %c16_i32 = arith.constant 16 : i32
        %104 = arith.muli %arg0, %c16_i32 : i32
        %105 = arith.index_cast %arg0 : i32 to index
        %c1_52 = arith.constant 1 : index
        %106 = memref.load %arg1[%105, %c1_52] : memref<2x8xi32, #tpu.memory_space<smem>>
        %107 = arith.addi %104, %106 : i32
        %c8_i32_53 = arith.constant 8 : i32
        %108 = arith.muli %0, %c8_i32_53 : i32
        %c1_i32_54 = arith.constant 1 : i32
        %109 = arith.addi %108, %c1_i32_54 : i32
        %c8_i32_55 = arith.constant 8 : i32
        %110 = arith.muli %0, %c8_i32_55 : i32
        %c1_i32_56 = arith.constant 1 : i32
        %111 = arith.addi %110, %c1_i32_56 : i32
        %c0_i32_57 = arith.constant 0 : i32
        %112 = tpu.memref_slice %arg4[%107, %c0_i32_57] : memref<32x128xf32, #tpu.memory_space<any>> -> memref<1x128xf32, #tpu.memory_space<any>>
        %c0_i32_58 = arith.constant 0 : i32
        %113 = tpu.memref_slice %arg6[%109, %c0_i32_58] : memref<16x128xf32, #tpu.memory_space<vmem>> -> memref<1x128xf32, #tpu.memory_space<vmem>>
        %114 = tpu.memref_slice %arg7[%111] : memref<16x!tpu.dma_semaphore, #tpu.memory_space<semaphore_mem>> -> memref<1x!tpu.dma_semaphore, #tpu.memory_space<semaphore_mem>>
        %115 = tpu.memref_squeeze %114 : memref<1x!tpu.dma_semaphore, #tpu.memory_space<semaphore_mem>> -> memref<!tpu.dma_semaphore, #tpu.memory_space<semaphore_mem>>
        tpu.enqueue_dma source(%112 : memref<1x128xf32, #tpu.memory_space<any>>) target(%113 : memref<1x128xf32, #tpu.memory_space<vmem>>) target_semaphore(%115 : memref<!tpu.dma_semaphore, #tpu.memory_space<semaphore_mem>>)
      } else {
      }
      %74 = arith.index_cast %arg0 : i32 to index
      %c2_34 = arith.constant 2 : index
      %75 = memref.load %arg2[%74, %c2_34] : memref<2x8xi32, #tpu.memory_space<smem>>
      %c0_i32_35 = arith.constant 0 : i32
      %76 = arith.cmpi ne, %75, %c0_i32_35 : i32
      %77 = arith.extui %76 : i1 to i32
      %c0_i32_36 = arith.constant 0 : i32
      %78 = arith.cmpi ne, %77, %c0_i32_36 : i32
      scf.if %78 {
        %c16_i32 = arith.constant 16 : i32
        %104 = arith.muli %arg0, %c16_i32 : i32
        %105 = arith.index_cast %arg0 : i32 to index
        %c2_52 = arith.constant 2 : index
        %106 = memref.load %arg1[%105, %c2_52] : memref<2x8xi32, #tpu.memory_space<smem>>
        %107 = arith.addi %104, %106 : i32
        %c8_i32_53 = arith.constant 8 : i32
        %108 = arith.muli %0, %c8_i32_53 : i32
        %c2_i32_54 = arith.constant 2 : i32
        %109 = arith.addi %108, %c2_i32_54 : i32
        %c8_i32_55 = arith.constant 8 : i32
        %110 = arith.muli %0, %c8_i32_55 : i32
        %c2_i32_56 = arith.constant 2 : i32
        %111 = arith.addi %110, %c2_i32_56 : i32
        %c0_i32_57 = arith.constant 0 : i32
        %112 = tpu.memref_slice %arg4[%107, %c0_i32_57] : memref<32x128xf32, #tpu.memory_space<any>> -> memref<1x128xf32, #tpu.memory_space<any>>
        %c0_i32_58 = arith.constant 0 : i32
        %113 = tpu.memref_slice %arg6[%109, %c0_i32_58] : memref<16x128xf32, #tpu.memory_space<vmem>> -> memref<1x128xf32, #tpu.memory_space<vmem>>
        %114 = tpu.memref_slice %arg7[%111] : memref<16x!tpu.dma_semaphore, #tpu.memory_space<semaphore_mem>> -> memref<1x!tpu.dma_semaphore, #tpu.memory_space<semaphore_mem>>
        %115 = tpu.memref_squeeze %114 : memref<1x!tpu.dma_semaphore, #tpu.memory_space<semaphore_mem>> -> memref<!tpu.dma_semaphore, #tpu.memory_space<semaphore_mem>>
        tpu.enqueue_dma source(%112 : memref<1x128xf32, #tpu.memory_space<any>>) target(%113 : memref<1x128xf32, #tpu.memory_space<vmem>>) target_semaphore(%115 : memref<!tpu.dma_semaphore, #tpu.memory_space<semaphore_mem>>)
      } else {
      }
      %79 = arith.index_cast %arg0 : i32 to index
      %c3_37 = arith.constant 3 : index
      %80 = memref.load %arg2[%79, %c3_37] : memref<2x8xi32, #tpu.memory_space<smem>>
      %c0_i32_38 = arith.constant 0 : i32
      %81 = arith.cmpi ne, %80, %c0_i32_38 : i32
      %82 = arith.extui %81 : i1 to i32
      %c0_i32_39 = arith.constant 0 : i32
      %83 = arith.cmpi ne, %82, %c0_i32_39 : i32
      scf.if %83 {
        %c16_i32 = arith.constant 16 : i32
        %104 = arith.muli %arg0, %c16_i32 : i32
        %105 = arith.index_cast %arg0 : i32 to index
        %c3_52 = arith.constant 3 : index
        %106 = memref.load %arg1[%105, %c3_52] : memref<2x8xi32, #tpu.memory_space<smem>>
        %107 = arith.addi %104, %106 : i32
        %c8_i32_53 = arith.constant 8 : i32
        %108 = arith.muli %0, %c8_i32_53 : i32
        %c3_i32 = arith.constant 3 : i32
        %109 = arith.addi %108, %c3_i32 : i32
        %c8_i32_54 = arith.constant 8 : i32
        %110 = arith.muli %0, %c8_i32_54 : i32
        %c3_i32_55 = arith.constant 3 : i32
        %111 = arith.addi %110, %c3_i32_55 : i32
        %c0_i32_56 = arith.constant 0 : i32
        %112 = tpu.memref_slice %arg4[%107, %c0_i32_56] : memref<32x128xf32, #tpu.memory_space<any>> -> memref<1x128xf32, #tpu.memory_space<any>>
        %c0_i32_57 = arith.constant 0 : i32
        %113 = tpu.memref_slice %arg6[%109, %c0_i32_57] : memref<16x128xf32, #tpu.memory_space<vmem>> -> memref<1x128xf32, #tpu.memory_space<vmem>>
        %114 = tpu.memref_slice %arg7[%111] : memref<16x!tpu.dma_semaphore, #tpu.memory_space<semaphore_mem>> -> memref<1x!tpu.dma_semaphore, #tpu.memory_space<semaphore_mem>>
        %115 = tpu.memref_squeeze %114 : memref<1x!tpu.dma_semaphore, #tpu.memory_space<semaphore_mem>> -> memref<!tpu.dma_semaphore, #tpu.memory_space<semaphore_mem>>
        tpu.enqueue_dma source(%112 : memref<1x128xf32, #tpu.memory_space<any>>) target(%113 : memref<1x128xf32, #tpu.memory_space<vmem>>) target_semaphore(%115 : memref<!tpu.dma_semaphore, #tpu.memory_space<semaphore_mem>>)
      } else {
      }
      %84 = arith.index_cast %arg0 : i32 to index
      %c4_40 = arith.constant 4 : index
      %85 = memref.load %arg2[%84, %c4_40] : memref<2x8xi32, #tpu.memory_space<smem>>
      %c0_i32_41 = arith.constant 0 : i32
      %86 = arith.cmpi ne, %85, %c0_i32_41 : i32
      %87 = arith.extui %86 : i1 to i32
      %c0_i32_42 = arith.constant 0 : i32
      %88 = arith.cmpi ne, %87, %c0_i32_42 : i32
      scf.if %88 {
        %c16_i32 = arith.constant 16 : i32
        %104 = arith.muli %arg0, %c16_i32 : i32
        %105 = arith.index_cast %arg0 : i32 to index
        %c4_52 = arith.constant 4 : index
        %106 = memref.load %arg1[%105, %c4_52] : memref<2x8xi32, #tpu.memory_space<smem>>
        %107 = arith.addi %104, %106 : i32
        %c8_i32_53 = arith.constant 8 : i32
        %108 = arith.muli %0, %c8_i32_53 : i32
        %c4_i32 = arith.constant 4 : i32
        %109 = arith.addi %108, %c4_i32 : i32
        %c8_i32_54 = arith.constant 8 : i32
        %110 = arith.muli %0, %c8_i32_54 : i32
        %c4_i32_55 = arith.constant 4 : i32
        %111 = arith.addi %110, %c4_i32_55 : i32
        %c0_i32_56 = arith.constant 0 : i32
        %112 = tpu.memref_slice %arg4[%107, %c0_i32_56] : memref<32x128xf32, #tpu.memory_space<any>> -> memref<1x128xf32, #tpu.memory_space<any>>
        %c0_i32_57 = arith.constant 0 : i32
        %113 = tpu.memref_slice %arg6[%109, %c0_i32_57] : memref<16x128xf32, #tpu.memory_space<vmem>> -> memref<1x128xf32, #tpu.memory_space<vmem>>
        %114 = tpu.memref_slice %arg7[%111] : memref<16x!tpu.dma_semaphore, #tpu.memory_space<semaphore_mem>> -> memref<1x!tpu.dma_semaphore, #tpu.memory_space<semaphore_mem>>
        %115 = tpu.memref_squeeze %114 : memref<1x!tpu.dma_semaphore, #tpu.memory_space<semaphore_mem>> -> memref<!tpu.dma_semaphore, #tpu.memory_space<semaphore_mem>>
        tpu.enqueue_dma source(%112 : memref<1x128xf32, #tpu.memory_space<any>>) target(%113 : memref<1x128xf32, #tpu.memory_space<vmem>>) target_semaphore(%115 : memref<!tpu.dma_semaphore, #tpu.memory_space<semaphore_mem>>)
      } else {
      }
      %89 = arith.index_cast %arg0 : i32 to index
      %c5_43 = arith.constant 5 : index
      %90 = memref.load %arg2[%89, %c5_43] : memref<2x8xi32, #tpu.memory_space<smem>>
      %c0_i32_44 = arith.constant 0 : i32
      %91 = arith.cmpi ne, %90, %c0_i32_44 : i32
      %92 = arith.extui %91 : i1 to i32
      %c0_i32_45 = arith.constant 0 : i32
      %93 = arith.cmpi ne, %92, %c0_i32_45 : i32
      scf.if %93 {
        %c16_i32 = arith.constant 16 : i32
        %104 = arith.muli %arg0, %c16_i32 : i32
        %105 = arith.index_cast %arg0 : i32 to index
        %c5_52 = arith.constant 5 : index
        %106 = memref.load %arg1[%105, %c5_52] : memref<2x8xi32, #tpu.memory_space<smem>>
        %107 = arith.addi %104, %106 : i32
        %c8_i32_53 = arith.constant 8 : i32
        %108 = arith.muli %0, %c8_i32_53 : i32
        %c5_i32 = arith.constant 5 : i32
        %109 = arith.addi %108, %c5_i32 : i32
        %c8_i32_54 = arith.constant 8 : i32
        %110 = arith.muli %0, %c8_i32_54 : i32
        %c5_i32_55 = arith.constant 5 : i32
        %111 = arith.addi %110, %c5_i32_55 : i32
        %c0_i32_56 = arith.constant 0 : i32
        %112 = tpu.memref_slice %arg4[%107, %c0_i32_56] : memref<32x128xf32, #tpu.memory_space<any>> -> memref<1x128xf32, #tpu.memory_space<any>>
        %c0_i32_57 = arith.constant 0 : i32
        %113 = tpu.memref_slice %arg6[%109, %c0_i32_57] : memref<16x128xf32, #tpu.memory_space<vmem>> -> memref<1x128xf32, #tpu.memory_space<vmem>>
        %114 = tpu.memref_slice %arg7[%111] : memref<16x!tpu.dma_semaphore, #tpu.memory_space<semaphore_mem>> -> memref<1x!tpu.dma_semaphore, #tpu.memory_space<semaphore_mem>>
        %115 = tpu.memref_squeeze %114 : memref<1x!tpu.dma_semaphore, #tpu.memory_space<semaphore_mem>> -> memref<!tpu.dma_semaphore, #tpu.memory_space<semaphore_mem>>
        tpu.enqueue_dma source(%112 : memref<1x128xf32, #tpu.memory_space<any>>) target(%113 : memref<1x128xf32, #tpu.memory_space<vmem>>) target_semaphore(%115 : memref<!tpu.dma_semaphore, #tpu.memory_space<semaphore_mem>>)
      } else {
      }
      %94 = arith.index_cast %arg0 : i32 to index
      %c6_46 = arith.constant 6 : index
      %95 = memref.load %arg2[%94, %c6_46] : memref<2x8xi32, #tpu.memory_space<smem>>
      %c0_i32_47 = arith.constant 0 : i32
      %96 = arith.cmpi ne, %95, %c0_i32_47 : i32
      %97 = arith.extui %96 : i1 to i32
      %c0_i32_48 = arith.constant 0 : i32
      %98 = arith.cmpi ne, %97, %c0_i32_48 : i32
      scf.if %98 {
        %c16_i32 = arith.constant 16 : i32
        %104 = arith.muli %arg0, %c16_i32 : i32
        %105 = arith.index_cast %arg0 : i32 to index
        %c6_52 = arith.constant 6 : index
        %106 = memref.load %arg1[%105, %c6_52] : memref<2x8xi32, #tpu.memory_space<smem>>
        %107 = arith.addi %104, %106 : i32
        %c8_i32_53 = arith.constant 8 : i32
        %108 = arith.muli %0, %c8_i32_53 : i32
        %c6_i32 = arith.constant 6 : i32
        %109 = arith.addi %108, %c6_i32 : i32
        %c8_i32_54 = arith.constant 8 : i32
        %110 = arith.muli %0, %c8_i32_54 : i32
        %c6_i32_55 = arith.constant 6 : i32
        %111 = arith.addi %110, %c6_i32_55 : i32
        %c0_i32_56 = arith.constant 0 : i32
        %112 = tpu.memref_slice %arg4[%107, %c0_i32_56] : memref<32x128xf32, #tpu.memory_space<any>> -> memref<1x128xf32, #tpu.memory_space<any>>
        %c0_i32_57 = arith.constant 0 : i32
        %113 = tpu.memref_slice %arg6[%109, %c0_i32_57] : memref<16x128xf32, #tpu.memory_space<vmem>> -> memref<1x128xf32, #tpu.memory_space<vmem>>
        %114 = tpu.memref_slice %arg7[%111] : memref<16x!tpu.dma_semaphore, #tpu.memory_space<semaphore_mem>> -> memref<1x!tpu.dma_semaphore, #tpu.memory_space<semaphore_mem>>
        %115 = tpu.memref_squeeze %114 : memref<1x!tpu.dma_semaphore, #tpu.memory_space<semaphore_mem>> -> memref<!tpu.dma_semaphore, #tpu.memory_space<semaphore_mem>>
        tpu.enqueue_dma source(%112 : memref<1x128xf32, #tpu.memory_space<any>>) target(%113 : memref<1x128xf32, #tpu.memory_space<vmem>>) target_semaphore(%115 : memref<!tpu.dma_semaphore, #tpu.memory_space<semaphore_mem>>)
      } else {
      }
      %99 = arith.index_cast %arg0 : i32 to index
      %c7_49 = arith.constant 7 : index
      %100 = memref.load %arg2[%99, %c7_49] : memref<2x8xi32, #tpu.memory_space<smem>>
      %c0_i32_50 = arith.constant 0 : i32
      %101 = arith.cmpi ne, %100, %c0_i32_50 : i32
      %102 = arith.extui %101 : i1 to i32
      %c0_i32_51 = arith.constant 0 : i32
      %103 = arith.cmpi ne, %102, %c0_i32_51 : i32
      scf.if %103 {
        %c16_i32 = arith.constant 16 : i32
        %104 = arith.muli %arg0, %c16_i32 : i32
        %105 = arith.index_cast %arg0 : i32 to index
        %c7_52 = arith.constant 7 : index
        %106 = memref.load %arg1[%105, %c7_52] : memref<2x8xi32, #tpu.memory_space<smem>>
        %107 = arith.addi %104, %106 : i32
        %c8_i32_53 = arith.constant 8 : i32
        %108 = arith.muli %0, %c8_i32_53 : i32
        %c7_i32 = arith.constant 7 : i32
        %109 = arith.addi %108, %c7_i32 : i32
        %c8_i32_54 = arith.constant 8 : i32
        %110 = arith.muli %0, %c8_i32_54 : i32
        %c7_i32_55 = arith.constant 7 : i32
        %111 = arith.addi %110, %c7_i32_55 : i32
        %c0_i32_56 = arith.constant 0 : i32
        %112 = tpu.memref_slice %arg4[%107, %c0_i32_56] : memref<32x128xf32, #tpu.memory_space<any>> -> memref<1x128xf32, #tpu.memory_space<any>>
        %c0_i32_57 = arith.constant 0 : i32
        %113 = tpu.memref_slice %arg6[%109, %c0_i32_57] : memref<16x128xf32, #tpu.memory_space<vmem>> -> memref<1x128xf32, #tpu.memory_space<vmem>>
        %114 = tpu.memref_slice %arg7[%111] : memref<16x!tpu.dma_semaphore, #tpu.memory_space<semaphore_mem>> -> memref<1x!tpu.dma_semaphore, #tpu.memory_space<semaphore_mem>>
        %115 = tpu.memref_squeeze %114 : memref<1x!tpu.dma_semaphore, #tpu.memory_space<semaphore_mem>> -> memref<!tpu.dma_semaphore, #tpu.memory_space<semaphore_mem>>
        tpu.enqueue_dma source(%112 : memref<1x128xf32, #tpu.memory_space<any>>) target(%113 : memref<1x128xf32, #tpu.memory_space<vmem>>) target_semaphore(%115 : memref<!tpu.dma_semaphore, #tpu.memory_space<semaphore_mem>>)
      } else {
      }
    } else {
    }
    %c1_i32_1 = arith.constant 1 : i32
    %5 = arith.addi %arg0, %c1_i32_1 : i32
    %c2_i32_2 = arith.constant 2 : i32
    %6 = arith.cmpi slt, %5, %c2_i32_2 : i32
    %7 = arith.extui %6 : i1 to i32
    %c0_i32_3 = arith.constant 0 : i32
    %8 = arith.cmpi ne, %7, %c0_i32_3 : i32
    scf.if %8 {
      %c1_i32_28 = arith.constant 1 : i32
      %64 = arith.addi %arg0, %c1_i32_28 : i32
      %65 = arith.index_cast %64 : i32 to index
      %c0_29 = arith.constant 0 : index
      %66 = memref.load %arg2[%65, %c0_29] : memref<2x8xi32, #tpu.memory_space<smem>>
      %c0_i32_30 = arith.constant 0 : i32
      %67 = arith.cmpi ne, %66, %c0_i32_30 : i32
      %68 = arith.extui %67 : i1 to i32
      %c0_i32_31 = arith.constant 0 : i32
      %69 = arith.cmpi ne, %68, %c0_i32_31 : i32
      scf.if %69 {
        %c16_i32 = arith.constant 16 : i32
        %105 = arith.muli %64, %c16_i32 : i32
        %106 = arith.index_cast %64 : i32 to index
        %c0_53 = arith.constant 0 : index
        %107 = memref.load %arg1[%106, %c0_53] : memref<2x8xi32, #tpu.memory_space<smem>>
        %108 = arith.addi %105, %107 : i32
        %c8_i32_54 = arith.constant 8 : i32
        %109 = arith.muli %1, %c8_i32_54 : i32
        %c0_i32_55 = arith.constant 0 : i32
        %110 = arith.addi %109, %c0_i32_55 : i32
        %c8_i32_56 = arith.constant 8 : i32
        %111 = arith.muli %1, %c8_i32_56 : i32
        %c0_i32_57 = arith.constant 0 : i32
        %112 = arith.addi %111, %c0_i32_57 : i32
        %c0_i32_58 = arith.constant 0 : i32
        %113 = tpu.memref_slice %arg4[%108, %c0_i32_58] : memref<32x128xf32, #tpu.memory_space<any>> -> memref<1x128xf32, #tpu.memory_space<any>>
        %c0_i32_59 = arith.constant 0 : i32
        %114 = tpu.memref_slice %arg6[%110, %c0_i32_59] : memref<16x128xf32, #tpu.memory_space<vmem>> -> memref<1x128xf32, #tpu.memory_space<vmem>>
        %115 = tpu.memref_slice %arg7[%112] : memref<16x!tpu.dma_semaphore, #tpu.memory_space<semaphore_mem>> -> memref<1x!tpu.dma_semaphore, #tpu.memory_space<semaphore_mem>>
        %116 = tpu.memref_squeeze %115 : memref<1x!tpu.dma_semaphore, #tpu.memory_space<semaphore_mem>> -> memref<!tpu.dma_semaphore, #tpu.memory_space<semaphore_mem>>
        tpu.enqueue_dma source(%113 : memref<1x128xf32, #tpu.memory_space<any>>) target(%114 : memref<1x128xf32, #tpu.memory_space<vmem>>) target_semaphore(%116 : memref<!tpu.dma_semaphore, #tpu.memory_space<semaphore_mem>>)
      } else {
      }
      %70 = arith.index_cast %64 : i32 to index
      %c1_32 = arith.constant 1 : index
      %71 = memref.load %arg2[%70, %c1_32] : memref<2x8xi32, #tpu.memory_space<smem>>
      %c0_i32_33 = arith.constant 0 : i32
      %72 = arith.cmpi ne, %71, %c0_i32_33 : i32
      %73 = arith.extui %72 : i1 to i32
      %c0_i32_34 = arith.constant 0 : i32
      %74 = arith.cmpi ne, %73, %c0_i32_34 : i32
      scf.if %74 {
        %c16_i32 = arith.constant 16 : i32
        %105 = arith.muli %64, %c16_i32 : i32
        %106 = arith.index_cast %64 : i32 to index
        %c1_53 = arith.constant 1 : index
        %107 = memref.load %arg1[%106, %c1_53] : memref<2x8xi32, #tpu.memory_space<smem>>
        %108 = arith.addi %105, %107 : i32
        %c8_i32_54 = arith.constant 8 : i32
        %109 = arith.muli %1, %c8_i32_54 : i32
        %c1_i32_55 = arith.constant 1 : i32
        %110 = arith.addi %109, %c1_i32_55 : i32
        %c8_i32_56 = arith.constant 8 : i32
        %111 = arith.muli %1, %c8_i32_56 : i32
        %c1_i32_57 = arith.constant 1 : i32
        %112 = arith.addi %111, %c1_i32_57 : i32
        %c0_i32_58 = arith.constant 0 : i32
        %113 = tpu.memref_slice %arg4[%108, %c0_i32_58] : memref<32x128xf32, #tpu.memory_space<any>> -> memref<1x128xf32, #tpu.memory_space<any>>
        %c0_i32_59 = arith.constant 0 : i32
        %114 = tpu.memref_slice %arg6[%110, %c0_i32_59] : memref<16x128xf32, #tpu.memory_space<vmem>> -> memref<1x128xf32, #tpu.memory_space<vmem>>
        %115 = tpu.memref_slice %arg7[%112] : memref<16x!tpu.dma_semaphore, #tpu.memory_space<semaphore_mem>> -> memref<1x!tpu.dma_semaphore, #tpu.memory_space<semaphore_mem>>
        %116 = tpu.memref_squeeze %115 : memref<1x!tpu.dma_semaphore, #tpu.memory_space<semaphore_mem>> -> memref<!tpu.dma_semaphore, #tpu.memory_space<semaphore_mem>>
        tpu.enqueue_dma source(%113 : memref<1x128xf32, #tpu.memory_space<any>>) target(%114 : memref<1x128xf32, #tpu.memory_space<vmem>>) target_semaphore(%116 : memref<!tpu.dma_semaphore, #tpu.memory_space<semaphore_mem>>)
      } else {
      }
      %75 = arith.index_cast %64 : i32 to index
      %c2_35 = arith.constant 2 : index
      %76 = memref.load %arg2[%75, %c2_35] : memref<2x8xi32, #tpu.memory_space<smem>>
      %c0_i32_36 = arith.constant 0 : i32
      %77 = arith.cmpi ne, %76, %c0_i32_36 : i32
      %78 = arith.extui %77 : i1 to i32
      %c0_i32_37 = arith.constant 0 : i32
      %79 = arith.cmpi ne, %78, %c0_i32_37 : i32
      scf.if %79 {
        %c16_i32 = arith.constant 16 : i32
        %105 = arith.muli %64, %c16_i32 : i32
        %106 = arith.index_cast %64 : i32 to index
        %c2_53 = arith.constant 2 : index
        %107 = memref.load %arg1[%106, %c2_53] : memref<2x8xi32, #tpu.memory_space<smem>>
        %108 = arith.addi %105, %107 : i32
        %c8_i32_54 = arith.constant 8 : i32
        %109 = arith.muli %1, %c8_i32_54 : i32
        %c2_i32_55 = arith.constant 2 : i32
        %110 = arith.addi %109, %c2_i32_55 : i32
        %c8_i32_56 = arith.constant 8 : i32
        %111 = arith.muli %1, %c8_i32_56 : i32
        %c2_i32_57 = arith.constant 2 : i32
        %112 = arith.addi %111, %c2_i32_57 : i32
        %c0_i32_58 = arith.constant 0 : i32
        %113 = tpu.memref_slice %arg4[%108, %c0_i32_58] : memref<32x128xf32, #tpu.memory_space<any>> -> memref<1x128xf32, #tpu.memory_space<any>>
        %c0_i32_59 = arith.constant 0 : i32
        %114 = tpu.memref_slice %arg6[%110, %c0_i32_59] : memref<16x128xf32, #tpu.memory_space<vmem>> -> memref<1x128xf32, #tpu.memory_space<vmem>>
        %115 = tpu.memref_slice %arg7[%112] : memref<16x!tpu.dma_semaphore, #tpu.memory_space<semaphore_mem>> -> memref<1x!tpu.dma_semaphore, #tpu.memory_space<semaphore_mem>>
        %116 = tpu.memref_squeeze %115 : memref<1x!tpu.dma_semaphore, #tpu.memory_space<semaphore_mem>> -> memref<!tpu.dma_semaphore, #tpu.memory_space<semaphore_mem>>
        tpu.enqueue_dma source(%113 : memref<1x128xf32, #tpu.memory_space<any>>) target(%114 : memref<1x128xf32, #tpu.memory_space<vmem>>) target_semaphore(%116 : memref<!tpu.dma_semaphore, #tpu.memory_space<semaphore_mem>>)
      } else {
      }
      %80 = arith.index_cast %64 : i32 to index
      %c3_38 = arith.constant 3 : index
      %81 = memref.load %arg2[%80, %c3_38] : memref<2x8xi32, #tpu.memory_space<smem>>
      %c0_i32_39 = arith.constant 0 : i32
      %82 = arith.cmpi ne, %81, %c0_i32_39 : i32
      %83 = arith.extui %82 : i1 to i32
      %c0_i32_40 = arith.constant 0 : i32
      %84 = arith.cmpi ne, %83, %c0_i32_40 : i32
      scf.if %84 {
        %c16_i32 = arith.constant 16 : i32
        %105 = arith.muli %64, %c16_i32 : i32
        %106 = arith.index_cast %64 : i32 to index
        %c3_53 = arith.constant 3 : index
        %107 = memref.load %arg1[%106, %c3_53] : memref<2x8xi32, #tpu.memory_space<smem>>
        %108 = arith.addi %105, %107 : i32
        %c8_i32_54 = arith.constant 8 : i32
        %109 = arith.muli %1, %c8_i32_54 : i32
        %c3_i32 = arith.constant 3 : i32
        %110 = arith.addi %109, %c3_i32 : i32
        %c8_i32_55 = arith.constant 8 : i32
        %111 = arith.muli %1, %c8_i32_55 : i32
        %c3_i32_56 = arith.constant 3 : i32
        %112 = arith.addi %111, %c3_i32_56 : i32
        %c0_i32_57 = arith.constant 0 : i32
        %113 = tpu.memref_slice %arg4[%108, %c0_i32_57] : memref<32x128xf32, #tpu.memory_space<any>> -> memref<1x128xf32, #tpu.memory_space<any>>
        %c0_i32_58 = arith.constant 0 : i32
        %114 = tpu.memref_slice %arg6[%110, %c0_i32_58] : memref<16x128xf32, #tpu.memory_space<vmem>> -> memref<1x128xf32, #tpu.memory_space<vmem>>
        %115 = tpu.memref_slice %arg7[%112] : memref<16x!tpu.dma_semaphore, #tpu.memory_space<semaphore_mem>> -> memref<1x!tpu.dma_semaphore, #tpu.memory_space<semaphore_mem>>
        %116 = tpu.memref_squeeze %115 : memref<1x!tpu.dma_semaphore, #tpu.memory_space<semaphore_mem>> -> memref<!tpu.dma_semaphore, #tpu.memory_space<semaphore_mem>>
        tpu.enqueue_dma source(%113 : memref<1x128xf32, #tpu.memory_space<any>>) target(%114 : memref<1x128xf32, #tpu.memory_space<vmem>>) target_semaphore(%116 : memref<!tpu.dma_semaphore, #tpu.memory_space<semaphore_mem>>)
      } else {
      }
      %85 = arith.index_cast %64 : i32 to index
      %c4_41 = arith.constant 4 : index
      %86 = memref.load %arg2[%85, %c4_41] : memref<2x8xi32, #tpu.memory_space<smem>>
      %c0_i32_42 = arith.constant 0 : i32
      %87 = arith.cmpi ne, %86, %c0_i32_42 : i32
      %88 = arith.extui %87 : i1 to i32
      %c0_i32_43 = arith.constant 0 : i32
      %89 = arith.cmpi ne, %88, %c0_i32_43 : i32
      scf.if %89 {
        %c16_i32 = arith.constant 16 : i32
        %105 = arith.muli %64, %c16_i32 : i32
        %106 = arith.index_cast %64 : i32 to index
        %c4_53 = arith.constant 4 : index
        %107 = memref.load %arg1[%106, %c4_53] : memref<2x8xi32, #tpu.memory_space<smem>>
        %108 = arith.addi %105, %107 : i32
        %c8_i32_54 = arith.constant 8 : i32
        %109 = arith.muli %1, %c8_i32_54 : i32
        %c4_i32 = arith.constant 4 : i32
        %110 = arith.addi %109, %c4_i32 : i32
        %c8_i32_55 = arith.constant 8 : i32
        %111 = arith.muli %1, %c8_i32_55 : i32
        %c4_i32_56 = arith.constant 4 : i32
        %112 = arith.addi %111, %c4_i32_56 : i32
        %c0_i32_57 = arith.constant 0 : i32
        %113 = tpu.memref_slice %arg4[%108, %c0_i32_57] : memref<32x128xf32, #tpu.memory_space<any>> -> memref<1x128xf32, #tpu.memory_space<any>>
        %c0_i32_58 = arith.constant 0 : i32
        %114 = tpu.memref_slice %arg6[%110, %c0_i32_58] : memref<16x128xf32, #tpu.memory_space<vmem>> -> memref<1x128xf32, #tpu.memory_space<vmem>>
        %115 = tpu.memref_slice %arg7[%112] : memref<16x!tpu.dma_semaphore, #tpu.memory_space<semaphore_mem>> -> memref<1x!tpu.dma_semaphore, #tpu.memory_space<semaphore_mem>>
        %116 = tpu.memref_squeeze %115 : memref<1x!tpu.dma_semaphore, #tpu.memory_space<semaphore_mem>> -> memref<!tpu.dma_semaphore, #tpu.memory_space<semaphore_mem>>
        tpu.enqueue_dma source(%113 : memref<1x128xf32, #tpu.memory_space<any>>) target(%114 : memref<1x128xf32, #tpu.memory_space<vmem>>) target_semaphore(%116 : memref<!tpu.dma_semaphore, #tpu.memory_space<semaphore_mem>>)
      } else {
      }
      %90 = arith.index_cast %64 : i32 to index
      %c5_44 = arith.constant 5 : index
      %91 = memref.load %arg2[%90, %c5_44] : memref<2x8xi32, #tpu.memory_space<smem>>
      %c0_i32_45 = arith.constant 0 : i32
      %92 = arith.cmpi ne, %91, %c0_i32_45 : i32
      %93 = arith.extui %92 : i1 to i32
      %c0_i32_46 = arith.constant 0 : i32
      %94 = arith.cmpi ne, %93, %c0_i32_46 : i32
      scf.if %94 {
        %c16_i32 = arith.constant 16 : i32
        %105 = arith.muli %64, %c16_i32 : i32
        %106 = arith.index_cast %64 : i32 to index
        %c5_53 = arith.constant 5 : index
        %107 = memref.load %arg1[%106, %c5_53] : memref<2x8xi32, #tpu.memory_space<smem>>
        %108 = arith.addi %105, %107 : i32
        %c8_i32_54 = arith.constant 8 : i32
        %109 = arith.muli %1, %c8_i32_54 : i32
        %c5_i32 = arith.constant 5 : i32
        %110 = arith.addi %109, %c5_i32 : i32
        %c8_i32_55 = arith.constant 8 : i32
        %111 = arith.muli %1, %c8_i32_55 : i32
        %c5_i32_56 = arith.constant 5 : i32
        %112 = arith.addi %111, %c5_i32_56 : i32
        %c0_i32_57 = arith.constant 0 : i32
        %113 = tpu.memref_slice %arg4[%108, %c0_i32_57] : memref<32x128xf32, #tpu.memory_space<any>> -> memref<1x128xf32, #tpu.memory_space<any>>
        %c0_i32_58 = arith.constant 0 : i32
        %114 = tpu.memref_slice %arg6[%110, %c0_i32_58] : memref<16x128xf32, #tpu.memory_space<vmem>> -> memref<1x128xf32, #tpu.memory_space<vmem>>
        %115 = tpu.memref_slice %arg7[%112] : memref<16x!tpu.dma_semaphore, #tpu.memory_space<semaphore_mem>> -> memref<1x!tpu.dma_semaphore, #tpu.memory_space<semaphore_mem>>
        %116 = tpu.memref_squeeze %115 : memref<1x!tpu.dma_semaphore, #tpu.memory_space<semaphore_mem>> -> memref<!tpu.dma_semaphore, #tpu.memory_space<semaphore_mem>>
        tpu.enqueue_dma source(%113 : memref<1x128xf32, #tpu.memory_space<any>>) target(%114 : memref<1x128xf32, #tpu.memory_space<vmem>>) target_semaphore(%116 : memref<!tpu.dma_semaphore, #tpu.memory_space<semaphore_mem>>)
      } else {
      }
      %95 = arith.index_cast %64 : i32 to index
      %c6_47 = arith.constant 6 : index
      %96 = memref.load %arg2[%95, %c6_47] : memref<2x8xi32, #tpu.memory_space<smem>>
      %c0_i32_48 = arith.constant 0 : i32
      %97 = arith.cmpi ne, %96, %c0_i32_48 : i32
      %98 = arith.extui %97 : i1 to i32
      %c0_i32_49 = arith.constant 0 : i32
      %99 = arith.cmpi ne, %98, %c0_i32_49 : i32
      scf.if %99 {
        %c16_i32 = arith.constant 16 : i32
        %105 = arith.muli %64, %c16_i32 : i32
        %106 = arith.index_cast %64 : i32 to index
        %c6_53 = arith.constant 6 : index
        %107 = memref.load %arg1[%106, %c6_53] : memref<2x8xi32, #tpu.memory_space<smem>>
        %108 = arith.addi %105, %107 : i32
        %c8_i32_54 = arith.constant 8 : i32
        %109 = arith.muli %1, %c8_i32_54 : i32
        %c6_i32 = arith.constant 6 : i32
        %110 = arith.addi %109, %c6_i32 : i32
        %c8_i32_55 = arith.constant 8 : i32
        %111 = arith.muli %1, %c8_i32_55 : i32
        %c6_i32_56 = arith.constant 6 : i32
        %112 = arith.addi %111, %c6_i32_56 : i32
        %c0_i32_57 = arith.constant 0 : i32
        %113 = tpu.memref_slice %arg4[%108, %c0_i32_57] : memref<32x128xf32, #tpu.memory_space<any>> -> memref<1x128xf32, #tpu.memory_space<any>>
        %c0_i32_58 = arith.constant 0 : i32
        %114 = tpu.memref_slice %arg6[%110, %c0_i32_58] : memref<16x128xf32, #tpu.memory_space<vmem>> -> memref<1x128xf32, #tpu.memory_space<vmem>>
        %115 = tpu.memref_slice %arg7[%112] : memref<16x!tpu.dma_semaphore, #tpu.memory_space<semaphore_mem>> -> memref<1x!tpu.dma_semaphore, #tpu.memory_space<semaphore_mem>>
        %116 = tpu.memref_squeeze %115 : memref<1x!tpu.dma_semaphore, #tpu.memory_space<semaphore_mem>> -> memref<!tpu.dma_semaphore, #tpu.memory_space<semaphore_mem>>
        tpu.enqueue_dma source(%113 : memref<1x128xf32, #tpu.memory_space<any>>) target(%114 : memref<1x128xf32, #tpu.memory_space<vmem>>) target_semaphore(%116 : memref<!tpu.dma_semaphore, #tpu.memory_space<semaphore_mem>>)
      } else {
      }
      %100 = arith.index_cast %64 : i32 to index
      %c7_50 = arith.constant 7 : index
      %101 = memref.load %arg2[%100, %c7_50] : memref<2x8xi32, #tpu.memory_space<smem>>
      %c0_i32_51 = arith.constant 0 : i32
      %102 = arith.cmpi ne, %101, %c0_i32_51 : i32
      %103 = arith.extui %102 : i1 to i32
      %c0_i32_52 = arith.constant 0 : i32
      %104 = arith.cmpi ne, %103, %c0_i32_52 : i32
      scf.if %104 {
        %c16_i32 = arith.constant 16 : i32
        %105 = arith.muli %64, %c16_i32 : i32
        %106 = arith.index_cast %64 : i32 to index
        %c7_53 = arith.constant 7 : index
        %107 = memref.load %arg1[%106, %c7_53] : memref<2x8xi32, #tpu.memory_space<smem>>
        %108 = arith.addi %105, %107 : i32
        %c8_i32_54 = arith.constant 8 : i32
        %109 = arith.muli %1, %c8_i32_54 : i32
        %c7_i32 = arith.constant 7 : i32
        %110 = arith.addi %109, %c7_i32 : i32
        %c8_i32_55 = arith.constant 8 : i32
        %111 = arith.muli %1, %c8_i32_55 : i32
        %c7_i32_56 = arith.constant 7 : i32
        %112 = arith.addi %111, %c7_i32_56 : i32
        %c0_i32_57 = arith.constant 0 : i32
        %113 = tpu.memref_slice %arg4[%108, %c0_i32_57] : memref<32x128xf32, #tpu.memory_space<any>> -> memref<1x128xf32, #tpu.memory_space<any>>
        %c0_i32_58 = arith.constant 0 : i32
        %114 = tpu.memref_slice %arg6[%110, %c0_i32_58] : memref<16x128xf32, #tpu.memory_space<vmem>> -> memref<1x128xf32, #tpu.memory_space<vmem>>
        %115 = tpu.memref_slice %arg7[%112] : memref<16x!tpu.dma_semaphore, #tpu.memory_space<semaphore_mem>> -> memref<1x!tpu.dma_semaphore, #tpu.memory_space<semaphore_mem>>
        %116 = tpu.memref_squeeze %115 : memref<1x!tpu.dma_semaphore, #tpu.memory_space<semaphore_mem>> -> memref<!tpu.dma_semaphore, #tpu.memory_space<semaphore_mem>>
        tpu.enqueue_dma source(%113 : memref<1x128xf32, #tpu.memory_space<any>>) target(%114 : memref<1x128xf32, #tpu.memory_space<vmem>>) target_semaphore(%116 : memref<!tpu.dma_semaphore, #tpu.memory_space<semaphore_mem>>)
      } else {
      }
    } else {
    }
    %9 = arith.index_cast %arg0 : i32 to index
    %c0 = arith.constant 0 : index
    %10 = memref.load %arg2[%9, %c0] : memref<2x8xi32, #tpu.memory_space<smem>>
    %c0_i32_4 = arith.constant 0 : i32
    %11 = arith.cmpi ne, %10, %c0_i32_4 : i32
    %12 = arith.extui %11 : i1 to i32
    %c0_i32_5 = arith.constant 0 : i32
    %13 = arith.cmpi ne, %12, %c0_i32_5 : i32
    scf.if %13 {
      %c8_i32_28 = arith.constant 8 : i32
      %64 = arith.muli %0, %c8_i32_28 : i32
      %c0_i32_29 = arith.constant 0 : i32
      %65 = arith.addi %64, %c0_i32_29 : i32
      %c8_i32_30 = arith.constant 8 : i32
      %66 = arith.muli %0, %c8_i32_30 : i32
      %c0_i32_31 = arith.constant 0 : i32
      %67 = arith.addi %66, %c0_i32_31 : i32
      %c0_i32_32 = arith.constant 0 : i32
      %c0_i32_33 = arith.constant 0 : i32
      %68 = tpu.memref_slice %arg4[%c0_i32_32, %c0_i32_33] : memref<32x128xf32, #tpu.memory_space<any>> -> memref<1x128xf32, #tpu.memory_space<any>>
      %c0_i32_34 = arith.constant 0 : i32
      %69 = tpu.memref_slice %arg6[%65, %c0_i32_34] : memref<16x128xf32, #tpu.memory_space<vmem>> -> memref<1x128xf32, #tpu.memory_space<vmem>>
      %70 = tpu.memref_slice %arg7[%67] : memref<16x!tpu.dma_semaphore, #tpu.memory_space<semaphore_mem>> -> memref<1x!tpu.dma_semaphore, #tpu.memory_space<semaphore_mem>>
      %71 = tpu.memref_squeeze %70 : memref<1x!tpu.dma_semaphore, #tpu.memory_space<semaphore_mem>> -> memref<!tpu.dma_semaphore, #tpu.memory_space<semaphore_mem>>
      tpu.wait_dma2 semaphore(%71 : memref<!tpu.dma_semaphore, #tpu.memory_space<semaphore_mem>>) src(%68 : memref<1x128xf32, #tpu.memory_space<any>>) dst(%69 : memref<1x128xf32, #tpu.memory_space<vmem>>)
    } else {
    }
    %14 = arith.index_cast %arg0 : i32 to index
    %c1 = arith.constant 1 : index
    %15 = memref.load %arg2[%14, %c1] : memref<2x8xi32, #tpu.memory_space<smem>>
    %c0_i32_6 = arith.constant 0 : i32
    %16 = arith.cmpi ne, %15, %c0_i32_6 : i32
    %17 = arith.extui %16 : i1 to i32
    %c0_i32_7 = arith.constant 0 : i32
    %18 = arith.cmpi ne, %17, %c0_i32_7 : i32
    scf.if %18 {
      %c8_i32_28 = arith.constant 8 : i32
      %64 = arith.muli %0, %c8_i32_28 : i32
      %c1_i32_29 = arith.constant 1 : i32
      %65 = arith.addi %64, %c1_i32_29 : i32
      %c8_i32_30 = arith.constant 8 : i32
      %66 = arith.muli %0, %c8_i32_30 : i32
      %c1_i32_31 = arith.constant 1 : i32
      %67 = arith.addi %66, %c1_i32_31 : i32
      %c0_i32_32 = arith.constant 0 : i32
      %c0_i32_33 = arith.constant 0 : i32
      %68 = tpu.memref_slice %arg4[%c0_i32_32, %c0_i32_33] : memref<32x128xf32, #tpu.memory_space<any>> -> memref<1x128xf32, #tpu.memory_space<any>>
      %c0_i32_34 = arith.constant 0 : i32
      %69 = tpu.memref_slice %arg6[%65, %c0_i32_34] : memref<16x128xf32, #tpu.memory_space<vmem>> -> memref<1x128xf32, #tpu.memory_space<vmem>>
      %70 = tpu.memref_slice %arg7[%67] : memref<16x!tpu.dma_semaphore, #tpu.memory_space<semaphore_mem>> -> memref<1x!tpu.dma_semaphore, #tpu.memory_space<semaphore_mem>>
      %71 = tpu.memref_squeeze %70 : memref<1x!tpu.dma_semaphore, #tpu.memory_space<semaphore_mem>> -> memref<!tpu.dma_semaphore, #tpu.memory_space<semaphore_mem>>
      tpu.wait_dma2 semaphore(%71 : memref<!tpu.dma_semaphore, #tpu.memory_space<semaphore_mem>>) src(%68 : memref<1x128xf32, #tpu.memory_space<any>>) dst(%69 : memref<1x128xf32, #tpu.memory_space<vmem>>)
    } else {
    }
    %19 = arith.index_cast %arg0 : i32 to index
    %c2 = arith.constant 2 : index
    %20 = memref.load %arg2[%19, %c2] : memref<2x8xi32, #tpu.memory_space<smem>>
    %c0_i32_8 = arith.constant 0 : i32
    %21 = arith.cmpi ne, %20, %c0_i32_8 : i32
    %22 = arith.extui %21 : i1 to i32
    %c0_i32_9 = arith.constant 0 : i32
    %23 = arith.cmpi ne, %22, %c0_i32_9 : i32
    scf.if %23 {
      %c8_i32_28 = arith.constant 8 : i32
      %64 = arith.muli %0, %c8_i32_28 : i32
      %c2_i32_29 = arith.constant 2 : i32
      %65 = arith.addi %64, %c2_i32_29 : i32
      %c8_i32_30 = arith.constant 8 : i32
      %66 = arith.muli %0, %c8_i32_30 : i32
      %c2_i32_31 = arith.constant 2 : i32
      %67 = arith.addi %66, %c2_i32_31 : i32
      %c0_i32_32 = arith.constant 0 : i32
      %c0_i32_33 = arith.constant 0 : i32
      %68 = tpu.memref_slice %arg4[%c0_i32_32, %c0_i32_33] : memref<32x128xf32, #tpu.memory_space<any>> -> memref<1x128xf32, #tpu.memory_space<any>>
      %c0_i32_34 = arith.constant 0 : i32
      %69 = tpu.memref_slice %arg6[%65, %c0_i32_34] : memref<16x128xf32, #tpu.memory_space<vmem>> -> memref<1x128xf32, #tpu.memory_space<vmem>>
      %70 = tpu.memref_slice %arg7[%67] : memref<16x!tpu.dma_semaphore, #tpu.memory_space<semaphore_mem>> -> memref<1x!tpu.dma_semaphore, #tpu.memory_space<semaphore_mem>>
      %71 = tpu.memref_squeeze %70 : memref<1x!tpu.dma_semaphore, #tpu.memory_space<semaphore_mem>> -> memref<!tpu.dma_semaphore, #tpu.memory_space<semaphore_mem>>
      tpu.wait_dma2 semaphore(%71 : memref<!tpu.dma_semaphore, #tpu.memory_space<semaphore_mem>>) src(%68 : memref<1x128xf32, #tpu.memory_space<any>>) dst(%69 : memref<1x128xf32, #tpu.memory_space<vmem>>)
    } else {
    }
    %24 = arith.index_cast %arg0 : i32 to index
    %c3 = arith.constant 3 : index
    %25 = memref.load %arg2[%24, %c3] : memref<2x8xi32, #tpu.memory_space<smem>>
    %c0_i32_10 = arith.constant 0 : i32
    %26 = arith.cmpi ne, %25, %c0_i32_10 : i32
    %27 = arith.extui %26 : i1 to i32
    %c0_i32_11 = arith.constant 0 : i32
    %28 = arith.cmpi ne, %27, %c0_i32_11 : i32
    scf.if %28 {
      %c8_i32_28 = arith.constant 8 : i32
      %64 = arith.muli %0, %c8_i32_28 : i32
      %c3_i32 = arith.constant 3 : i32
      %65 = arith.addi %64, %c3_i32 : i32
      %c8_i32_29 = arith.constant 8 : i32
      %66 = arith.muli %0, %c8_i32_29 : i32
      %c3_i32_30 = arith.constant 3 : i32
      %67 = arith.addi %66, %c3_i32_30 : i32
      %c0_i32_31 = arith.constant 0 : i32
      %c0_i32_32 = arith.constant 0 : i32
      %68 = tpu.memref_slice %arg4[%c0_i32_31, %c0_i32_32] : memref<32x128xf32, #tpu.memory_space<any>> -> memref<1x128xf32, #tpu.memory_space<any>>
      %c0_i32_33 = arith.constant 0 : i32
      %69 = tpu.memref_slice %arg6[%65, %c0_i32_33] : memref<16x128xf32, #tpu.memory_space<vmem>> -> memref<1x128xf32, #tpu.memory_space<vmem>>
      %70 = tpu.memref_slice %arg7[%67] : memref<16x!tpu.dma_semaphore, #tpu.memory_space<semaphore_mem>> -> memref<1x!tpu.dma_semaphore, #tpu.memory_space<semaphore_mem>>
      %71 = tpu.memref_squeeze %70 : memref<1x!tpu.dma_semaphore, #tpu.memory_space<semaphore_mem>> -> memref<!tpu.dma_semaphore, #tpu.memory_space<semaphore_mem>>
      tpu.wait_dma2 semaphore(%71 : memref<!tpu.dma_semaphore, #tpu.memory_space<semaphore_mem>>) src(%68 : memref<1x128xf32, #tpu.memory_space<any>>) dst(%69 : memref<1x128xf32, #tpu.memory_space<vmem>>)
    } else {
    }
    %29 = arith.index_cast %arg0 : i32 to index
    %c4 = arith.constant 4 : index
    %30 = memref.load %arg2[%29, %c4] : memref<2x8xi32, #tpu.memory_space<smem>>
    %c0_i32_12 = arith.constant 0 : i32
    %31 = arith.cmpi ne, %30, %c0_i32_12 : i32
    %32 = arith.extui %31 : i1 to i32
    %c0_i32_13 = arith.constant 0 : i32
    %33 = arith.cmpi ne, %32, %c0_i32_13 : i32
    scf.if %33 {
      %c8_i32_28 = arith.constant 8 : i32
      %64 = arith.muli %0, %c8_i32_28 : i32
      %c4_i32 = arith.constant 4 : i32
      %65 = arith.addi %64, %c4_i32 : i32
      %c8_i32_29 = arith.constant 8 : i32
      %66 = arith.muli %0, %c8_i32_29 : i32
      %c4_i32_30 = arith.constant 4 : i32
      %67 = arith.addi %66, %c4_i32_30 : i32
      %c0_i32_31 = arith.constant 0 : i32
      %c0_i32_32 = arith.constant 0 : i32
      %68 = tpu.memref_slice %arg4[%c0_i32_31, %c0_i32_32] : memref<32x128xf32, #tpu.memory_space<any>> -> memref<1x128xf32, #tpu.memory_space<any>>
      %c0_i32_33 = arith.constant 0 : i32
      %69 = tpu.memref_slice %arg6[%65, %c0_i32_33] : memref<16x128xf32, #tpu.memory_space<vmem>> -> memref<1x128xf32, #tpu.memory_space<vmem>>
      %70 = tpu.memref_slice %arg7[%67] : memref<16x!tpu.dma_semaphore, #tpu.memory_space<semaphore_mem>> -> memref<1x!tpu.dma_semaphore, #tpu.memory_space<semaphore_mem>>
      %71 = tpu.memref_squeeze %70 : memref<1x!tpu.dma_semaphore, #tpu.memory_space<semaphore_mem>> -> memref<!tpu.dma_semaphore, #tpu.memory_space<semaphore_mem>>
      tpu.wait_dma2 semaphore(%71 : memref<!tpu.dma_semaphore, #tpu.memory_space<semaphore_mem>>) src(%68 : memref<1x128xf32, #tpu.memory_space<any>>) dst(%69 : memref<1x128xf32, #tpu.memory_space<vmem>>)
    } else {
    }
    %34 = arith.index_cast %arg0 : i32 to index
    %c5 = arith.constant 5 : index
    %35 = memref.load %arg2[%34, %c5] : memref<2x8xi32, #tpu.memory_space<smem>>
    %c0_i32_14 = arith.constant 0 : i32
    %36 = arith.cmpi ne, %35, %c0_i32_14 : i32
    %37 = arith.extui %36 : i1 to i32
    %c0_i32_15 = arith.constant 0 : i32
    %38 = arith.cmpi ne, %37, %c0_i32_15 : i32
    scf.if %38 {
      %c8_i32_28 = arith.constant 8 : i32
      %64 = arith.muli %0, %c8_i32_28 : i32
      %c5_i32 = arith.constant 5 : i32
      %65 = arith.addi %64, %c5_i32 : i32
      %c8_i32_29 = arith.constant 8 : i32
      %66 = arith.muli %0, %c8_i32_29 : i32
      %c5_i32_30 = arith.constant 5 : i32
      %67 = arith.addi %66, %c5_i32_30 : i32
      %c0_i32_31 = arith.constant 0 : i32
      %c0_i32_32 = arith.constant 0 : i32
      %68 = tpu.memref_slice %arg4[%c0_i32_31, %c0_i32_32] : memref<32x128xf32, #tpu.memory_space<any>> -> memref<1x128xf32, #tpu.memory_space<any>>
      %c0_i32_33 = arith.constant 0 : i32
      %69 = tpu.memref_slice %arg6[%65, %c0_i32_33] : memref<16x128xf32, #tpu.memory_space<vmem>> -> memref<1x128xf32, #tpu.memory_space<vmem>>
      %70 = tpu.memref_slice %arg7[%67] : memref<16x!tpu.dma_semaphore, #tpu.memory_space<semaphore_mem>> -> memref<1x!tpu.dma_semaphore, #tpu.memory_space<semaphore_mem>>
      %71 = tpu.memref_squeeze %70 : memref<1x!tpu.dma_semaphore, #tpu.memory_space<semaphore_mem>> -> memref<!tpu.dma_semaphore, #tpu.memory_space<semaphore_mem>>
      tpu.wait_dma2 semaphore(%71 : memref<!tpu.dma_semaphore, #tpu.memory_space<semaphore_mem>>) src(%68 : memref<1x128xf32, #tpu.memory_space<any>>) dst(%69 : memref<1x128xf32, #tpu.memory_space<vmem>>)
    } else {
    }
    %39 = arith.index_cast %arg0 : i32 to index
    %c6 = arith.constant 6 : index
    %40 = memref.load %arg2[%39, %c6] : memref<2x8xi32, #tpu.memory_space<smem>>
    %c0_i32_16 = arith.constant 0 : i32
    %41 = arith.cmpi ne, %40, %c0_i32_16 : i32
    %42 = arith.extui %41 : i1 to i32
    %c0_i32_17 = arith.constant 0 : i32
    %43 = arith.cmpi ne, %42, %c0_i32_17 : i32
    scf.if %43 {
      %c8_i32_28 = arith.constant 8 : i32
      %64 = arith.muli %0, %c8_i32_28 : i32
      %c6_i32 = arith.constant 6 : i32
      %65 = arith.addi %64, %c6_i32 : i32
      %c8_i32_29 = arith.constant 8 : i32
      %66 = arith.muli %0, %c8_i32_29 : i32
      %c6_i32_30 = arith.constant 6 : i32
      %67 = arith.addi %66, %c6_i32_30 : i32
      %c0_i32_31 = arith.constant 0 : i32
      %c0_i32_32 = arith.constant 0 : i32
      %68 = tpu.memref_slice %arg4[%c0_i32_31, %c0_i32_32] : memref<32x128xf32, #tpu.memory_space<any>> -> memref<1x128xf32, #tpu.memory_space<any>>
      %c0_i32_33 = arith.constant 0 : i32
      %69 = tpu.memref_slice %arg6[%65, %c0_i32_33] : memref<16x128xf32, #tpu.memory_space<vmem>> -> memref<1x128xf32, #tpu.memory_space<vmem>>
      %70 = tpu.memref_slice %arg7[%67] : memref<16x!tpu.dma_semaphore, #tpu.memory_space<semaphore_mem>> -> memref<1x!tpu.dma_semaphore, #tpu.memory_space<semaphore_mem>>
      %71 = tpu.memref_squeeze %70 : memref<1x!tpu.dma_semaphore, #tpu.memory_space<semaphore_mem>> -> memref<!tpu.dma_semaphore, #tpu.memory_space<semaphore_mem>>
      tpu.wait_dma2 semaphore(%71 : memref<!tpu.dma_semaphore, #tpu.memory_space<semaphore_mem>>) src(%68 : memref<1x128xf32, #tpu.memory_space<any>>) dst(%69 : memref<1x128xf32, #tpu.memory_space<vmem>>)
    } else {
    }
    %44 = arith.index_cast %arg0 : i32 to index
    %c7 = arith.constant 7 : index
    %45 = memref.load %arg2[%44, %c7] : memref<2x8xi32, #tpu.memory_space<smem>>
    %c0_i32_18 = arith.constant 0 : i32
    %46 = arith.cmpi ne, %45, %c0_i32_18 : i32
    %47 = arith.extui %46 : i1 to i32
    %c0_i32_19 = arith.constant 0 : i32
    %48 = arith.cmpi ne, %47, %c0_i32_19 : i32
    scf.if %48 {
      %c8_i32_28 = arith.constant 8 : i32
      %64 = arith.muli %0, %c8_i32_28 : i32
      %c7_i32 = arith.constant 7 : i32
      %65 = arith.addi %64, %c7_i32 : i32
      %c8_i32_29 = arith.constant 8 : i32
      %66 = arith.muli %0, %c8_i32_29 : i32
      %c7_i32_30 = arith.constant 7 : i32
      %67 = arith.addi %66, %c7_i32_30 : i32
      %c0_i32_31 = arith.constant 0 : i32
      %c0_i32_32 = arith.constant 0 : i32
      %68 = tpu.memref_slice %arg4[%c0_i32_31, %c0_i32_32] : memref<32x128xf32, #tpu.memory_space<any>> -> memref<1x128xf32, #tpu.memory_space<any>>
      %c0_i32_33 = arith.constant 0 : i32
      %69 = tpu.memref_slice %arg6[%65, %c0_i32_33] : memref<16x128xf32, #tpu.memory_space<vmem>> -> memref<1x128xf32, #tpu.memory_space<vmem>>
      %70 = tpu.memref_slice %arg7[%67] : memref<16x!tpu.dma_semaphore, #tpu.memory_space<semaphore_mem>> -> memref<1x!tpu.dma_semaphore, #tpu.memory_space<semaphore_mem>>
      %71 = tpu.memref_squeeze %70 : memref<1x!tpu.dma_semaphore, #tpu.memory_space<semaphore_mem>> -> memref<!tpu.dma_semaphore, #tpu.memory_space<semaphore_mem>>
      tpu.wait_dma2 semaphore(%71 : memref<!tpu.dma_semaphore, #tpu.memory_space<semaphore_mem>>) src(%68 : memref<1x128xf32, #tpu.memory_space<any>>) dst(%69 : memref<1x128xf32, #tpu.memory_space<vmem>>)
    } else {
    }
    %c8_i32 = arith.constant 8 : i32
    %49 = arith.muli %0, %c8_i32 : i32
    %50 = tpu.assume_multiple %49, 8 : i32
    %51 = arith.index_cast %50 : i32 to index
    %c0_20 = arith.constant 0 : index
    %52 = vector.load %arg6[%51, %c0_20] : memref<16x128xf32, #tpu.memory_space<vmem>>, vector<8x128xf32>
    %c0_21 = arith.constant 0 : index
    %c0_22 = arith.constant 0 : index
    %c0_23 = arith.constant 0 : index
    %53 = vector.load %arg3[%c0_21, %c0_22, %c0_23] : memref<1x8x1xf32, #tpu.memory_space<vmem>>, vector<1x8x1xf32>
    %54 = vector.shape_cast %53 : vector<1x8x1xf32> to vector<8x1xf32>
    %cst = arith.constant 0.000000e+00 : f32
    %55 = vector.broadcast %cst : f32 to vector<8x1xf32>
    %56 = arith.cmpf one, %54, %55 : vector<8x1xf32>
    %cst_24 = arith.constant 0.000000e+00 : f32
    %57 = vector.broadcast %cst_24 : f32 to vector<8x128xf32>
    %58 = vector.shape_cast %56 : vector<8x1xi1> to vector<8x1xi1>
    %59 = vector.broadcast %58 : vector<8x1xi1> to vector<8x128xi1>
    %60 = arith.select %59, %52, %57 : vector<8x128xi1>, vector<8x128xf32>
    %c0_25 = arith.constant 0 : index
    %c0_26 = arith.constant 0 : index
    %c0_27 = arith.constant 0 : index
    %61 = vector.load %arg5[%c0_25, %c0_26, %c0_27] : memref<1x8x128xf32, #tpu.memory_space<vmem>>, vector<1x8x128xf32>
    %62 = vector.shape_cast %61 : vector<1x8x128xf32> to vector<8x128xf32>
    %63 = vector.shape_cast %60 : vector<8x128xf32> to vector<1x8x128xf32>
    tpu.vector_store %arg5[%c0_25, %c0_26, %c0_27], %63 {strides = array<i32>} : memref<1x8x128xf32, #tpu.memory_space<vmem>>, vector<1x8x128xf32>,
    return
  }
  func.func @transform_0(%arg0: i32, %arg1: memref<2x8xi32, #tpu.memory_space<smem>>, %arg2: memref<2x8xi32, #tpu.memory_space<smem>>) -> (i32, i32, i32) {
    %c0_i32 = arith.constant 0 : i32
    %c0_i32_0 = arith.constant 0 : i32
    %c0_i32_1 = arith.constant 0 : i32
    return %arg0, %c0_i32, %c0_i32_0 : i32, i32, i32
  }
  func.func @transform_2(%arg0: i32, %arg1: memref<2x8xi32, #tpu.memory_space<smem>>, %arg2: memref<2x8xi32, #tpu.memory_space<smem>>) -> (i32, i32, i32) {
    %c0_i32 = arith.constant 0 : i32
    %c0_i32_0 = arith.constant 0 : i32
    %c0_i32_1 = arith.constant 0 : i32
    return %arg0, %c0_i32, %c0_i32_0 : i32, i32, i32
  }
}

</mosaic_0001>

<llo_original>
// kernel: tpu_custom_call.1
$region0: #{tpu_custom_call.1}
  #allocation0 [shape = 'u32[]', space=smem, size = 0x4, offset = 0x4, fixed_abs, tag = 'smem constant byte address 0x4 - core index']
  #allocation1 [shape = 'u32[144,128]{1,0:T(1,128)}', space=vmem, size = 0x12000, scoped, tag = 'internal scratch']
  #allocation2 [shape = 'f32[16,128]{1,0:T(8,128)}', space=vmem, size = 0x2000, scoped, tag = 'scratch operand']
  #allocation3 [shape = 's32[16]{0}', space=sflag, size = 0x40, scoped, tag = 'scratch operand']
  #allocation4 [shape = 's32[1]{0}', space=sflag, size = 0x4, scoped, tag = 'scoped memory for tpu_custom_call.1']
  #allocation5 [shape = 'u8[1024]{0}', space=smem, size = 0x400, scoped, tag = 'prefetched SMEM operand 0']
  #allocation6 [shape = 'u8[1024]{0}', space=smem, size = 0x400, scoped, tag = 'prefetched SMEM operand 1']
  #allocation9 [shape = 's32[]', space=sflag, size = 0x4, offset = 0, fixed_abs, tag = 'sflag constant byte address 0x0 - dummy sync flag']
  #allocation10 [shape = 's32[]', space=sflag, size = 0x4, offset = 0, fixed_abs, tag = 'sflag constant byte address 0x0 - dummy sync flag']
  #allocation11 [shape = 'u32[]', space=smem, size = 0x4, offset = 0x44, fixed_abs, tag = 'smem constant byte address 0x44 - assertion arg 0']
  #allocation12 [shape = 'u32[]', space=smem, size = 0x4, offset = 0x48, fixed_abs, tag = 'smem constant byte address 0x48 - assertion arg 1']
  #allocation13 [shape = 's32[]', space=sflag, size = 0x4, offset = 0, fixed_abs, tag = 'sflag constant byte address 0x0 - dummy sync flag']
  #allocation14 [shape = 's32[]', space=sflag, size = 0x4, offset = 0, fixed_abs, tag = 'sflag constant byte address 0x0 - dummy sync flag']
  #allocation15 [shape = 's32[]', space=sflag, size = 0x4, offset = 0, fixed_abs, tag = 'sflag constant byte address 0x0 - dummy sync flag']
  #allocation16 [shape = 's32[]', space=sflag, size = 0x4, offset = 0, fixed_abs, tag = 'sflag constant byte address 0x0 - dummy sync flag']
  #allocation17 [shape = 's32[]', space=sflag, size = 0x4, offset = 0, fixed_abs, tag = 'sflag constant byte address 0x0 - dummy sync flag']
  #allocation18 [shape = 's32[]', space=sflag, size = 0x4, offset = 0, fixed_abs, tag = 'sflag constant byte address 0x0 - dummy sync flag']
  #allocation19 [shape = 's32[]', space=sflag, size = 0x4, offset = 0, fixed_abs, tag = 'sflag constant byte address 0x0 - dummy sync flag']
  #allocation20 [shape = 's32[]', space=sflag, size = 0x4, offset = 0, fixed_abs, tag = 'sflag constant byte address 0x0 - dummy sync flag']
  #allocation21 [shape = 's32[]', space=sflag, size = 0x4, offset = 0, fixed_abs, tag = 'sflag constant byte address 0x0 - dummy sync flag']
  #allocation22 [shape = 's32[]', space=sflag, size = 0x4, offset = 0, fixed_abs, tag = 'sflag constant byte address 0x0 - dummy sync flag']
  #allocation23 [shape = 's32[]', space=sflag, size = 0x4, offset = 0, fixed_abs, tag = 'sflag constant byte address 0x0 - dummy sync flag']
  #allocation24 [shape = 's32[]', space=sflag, size = 0x4, offset = 0, fixed_abs, tag = 'sflag constant byte address 0x0 - dummy sync flag']
  #allocation25 [shape = 's32[]', space=sflag, size = 0x4, offset = 0, fixed_abs, tag = 'sflag constant byte address 0x0 - dummy sync flag']
  #allocation26 [shape = 's32[]', space=sflag, size = 0x4, offset = 0, fixed_abs, tag = 'sflag constant byte address 0x0 - dummy sync flag']
  #allocation27 [shape = 's32[]', space=sflag, size = 0x4, offset = 0, fixed_abs, tag = 'sflag constant byte address 0x0 - dummy sync flag']
  #allocation28 [shape = 's32[]', space=sflag, size = 0x4, offset = 0, fixed_abs, tag = 'sflag constant byte address 0x0 - dummy sync flag']
  #allocation29 [shape = 's32[]', space=sflag, size = 0x4, offset = 0, fixed_abs, tag = 'sflag constant byte address 0x0 - dummy sync flag']
  #allocation30 [shape = 's32[]', space=sflag, size = 0x4, offset = 0, fixed_abs, tag = 'sflag constant byte address 0x0 - dummy sync flag']
  #allocation31 [shape = 's32[]', space=sflag, size = 0x4, offset = 0, fixed_abs, tag = 'sflag constant byte address 0x0 - dummy sync flag']
  #allocation32 [shape = 's32[]', space=sflag, size = 0x4, offset = 0, fixed_abs, tag = 'sflag constant byte address 0x0 - dummy sync flag']
  #allocation33 [shape = 's32[]', space=sflag, size = 0x4, offset = 0, fixed_abs, tag = 'sflag constant byte address 0x0 - dummy sync flag']
  #allocation34 [shape = 's32[]', space=sflag, size = 0x4, offset = 0, fixed_abs, tag = 'sflag constant byte address 0x0 - dummy sync flag']
  #allocation35 [shape = 's32[]', space=sflag, size = 0x4, offset = 0, fixed_abs, tag = 'sflag constant byte address 0x0 - dummy sync flag']
  #allocation36 [shape = 's32[]', space=sflag, size = 0x4, offset = 0, fixed_abs, tag = 'sflag constant byte address 0x0 - dummy sync flag']
  #allocation37 [shape = 's32[]', space=sflag, size = 0x4, offset = 0, fixed_abs, tag = 'sflag constant byte address 0x0 - dummy sync flag']
  #allocation38 [shape = 's32[]', space=sflag, size = 0x4, offset = 0, fixed_abs, tag = 'sflag constant byte address 0x0 - dummy sync flag']
  #allocation39 [shape = 's32[]', space=sflag, size = 0x4, offset = 0, fixed_abs, tag = 'sflag constant byte address 0x0 - dummy sync flag']
  #allocation40 [shape = 's32[]', space=sflag, size = 0x4, offset = 0, fixed_abs, tag = 'sflag constant byte address 0x0 - dummy sync flag']
  #allocation41 [shape = 's32[]', space=sflag, size = 0x4, offset = 0, fixed_abs, tag = 'sflag constant byte address 0x0 - dummy sync flag']
  #allocation42 [shape = 's32[]', space=sflag, size = 0x4, offset = 0, fixed_abs, tag = 'sflag constant byte address 0x0 - dummy sync flag']
  %s0 = inlined_call_operand.vmem [shape: s32[2,8], index: 0, kind: input, shape index: {}]
  %s1 = inlined_call_operand.vmem [shape: s32[2,8], index: 1, kind: input, shape index: {}]
  %s2 = inlined_call_operand.vmem [shape: f32[2,8,1], index: 2, kind: input, shape index: {}]
  %s3 = inlined_call_operand.hbm [shape: f32[32,128], index: 3, kind: input, shape index: {}]
  %s4 = inlined_call_operand.hbm [shape: f32[2,8,128], index: 4, kind: output, shape index: {}]
  %s5 = sld [smem:[#allocation0]]
  $region205: #{tpu_custom_call.1} parent=0
    _
  %s7 = ssub.s32 1, %s5
  %s8 = scalar_select 0, %s7, %s5
  %s9 = sshll.u32 %s0, 4
  %s10 = int_to_ptr.vmem [resolvable:$true] %s9
  %12 = dma.vmem_to_smem %s10, 32, [#allocation5], [#allocation4]
  %s13 = sshll.u32 %s1, 4
  %s14 = int_to_ptr.vmem [resolvable:$true] %s13
  %16 = dma.vmem_to_smem %s14, 32, [#allocation6], [#allocation4]
  %17 = dma.done [#allocation4], 64
  %18 = sfence
  $region1: #{tpu_custom_call.1} parent=0
    #allocation7 [shape = 'u8[8192]{0}', space=vmem, size = 0x2000, scoped, tag = 'output window, operand 0']
    #allocation8 [shape = 's32[2]{0}', space=sflag, size = 0x8, scoped, tag = 'scoped memory for tpu_custom_call.1']
    %19 = vsyncpa [#allocation8], 0
    %s20 = scalar_lea.sflag [#allocation8], 1
    %21 = vsyncpa %s20, 0
    loop: start=0, step=1, limit=4
    $region2: #{tpu_custom_call.1} parent=1 // loop_pre_header
      _
    $region3: #{tpu_custom_call.1} parent=1 // loop_header
      %s23 = sphi 0, %s27
      %p24 = scmp.ge.s32.totalorder %s23, 4
      %s33 = sphi 0, %s35
      %s36 = sphi 0, %s33
      %s37 = sphi 0, %s36
      %s53 = sphi 0, %s37
      %s59 = sphi 0, %s61
      %s62 = sphi 0, %s59
      %s63 = sphi 0, %s62
      %s79 = sphi 0, %s63
    $region4: #{tpu_custom_call.1} parent=1 // loop_header_branch
      %26 = sbr.rel (%p24) target = $region8
    $region5: #{tpu_custom_call.1} parent=1 // loop_body
      %s28 = ssub.s32 %s23, 1
      %s29 = ssub.s32 %s23, 2
      %s30 = sadd.s32 %s23, 1
      %s31 = ssub.s32 %s23, %s30
      %p32 = scmp.eq.s32.totalorder %s31, 0
      %s34 = sadd.s32 %s33, 1
      %s35 = scalar_select %p32, %s33, %s34
      %p38 = pneg %p32
      %p39 = scmp.eq.s32.totalorder %s23, 1
      %p40 = por %p38, %p39
      %p41 = scmp.ne.s32.totalorder %s33, %s36
      %p42 = scmp.eq.s32.totalorder %s23, 0
      %p43 = por %p41, %p42
      %p44 = scmp.ne.s32.totalorder %s33, %s36
      %p45 = scmp.eq.s32.totalorder %s28, 1
      %p46 = por %p44, %p45
      %p47 = scmp.ne.s32.totalorder %s36, %s37
      %p48 = scmp.eq.s32.totalorder %s28, 0
      %p49 = por %p47, %p48
      %p50 = scmp.ne.s32.totalorder %s36, %s37
      %p51 = scmp.eq.s32.totalorder %s29, 1
      %p52 = por %p50, %p51
      %p54 = scmp.ne.s32.totalorder %s37, %s53
      %p55 = scmp.eq.s32.totalorder %s29, 0
      %p56 = por %p54, %p55
      %s57 = ssub.s32 %s23, %s30
      %p58 = scmp.eq.s32.totalorder %s57, 0
      %s60 = sadd.s32 %s59, 1
      %s61 = scalar_select %p58, %s59, %s60
      %p64 = pneg %p58
      %p65 = scmp.eq.s32.totalorder %s23, 1
      %p66 = por %p64, %p65
      %p67 = scmp.ne.s32.totalorder %s59, %s62
      %p68 = scmp.eq.s32.totalorder %s23, 0
      %p69 = por %p67, %p68
      %p70 = scmp.ne.s32.totalorder %s59, %s62
      %p71 = scmp.eq.s32.totalorder %s28, 1
      %p72 = por %p70, %p71
      %p73 = scmp.ne.s32.totalorder %s62, %s63
      %p74 = scmp.eq.s32.totalorder %s28, 0
      %p75 = por %p73, %p74
      %p76 = scmp.ne.s32.totalorder %s62, %s63
      %p77 = scmp.eq.s32.totalorder %s29, 1
      %p78 = por %p76, %p77
      %p80 = scmp.ne.s32.totalorder %s63, %s79
      %p81 = scmp.eq.s32.totalorder %s29, 0
      %p82 = por %p80, %p81
      %p83 = scmp.le.s32.totalorder 1, %s23
      %p84 = scmp.lt.s32.totalorder %s23, 3
      %p85 = pnand %p83, %p84
      %p86 = pneg %p85
      // Predicated region
      $region9: #{tpu_custom_call.1} parent=5 // pred_check
        _
      $region10: #{tpu_custom_call.1} parent=5 // pred_check_branch
        %88 = sbr.rel (%p85) target = $region12
      $region11: #{tpu_custom_call.1} parent=5 // pred_region
        %s89 = ssub.s32 %s23, 1
      $region12: #{tpu_custom_call.1} parent=5 // pred_fallthru
        _
      %p90 = scmp.lt.s32.totalorder %s23, 2
      // Predicated region
      $region13: #{tpu_custom_call.1} parent=5 // pred_check
        %p91 = pneg %p90
      $region14: #{tpu_custom_call.1} parent=5 // pred_check_branch
        %93 = sbr.rel (%p91) target = $region16
      $region15: #{tpu_custom_call.1} parent=5 // pred_region
        // Predicated region
        $region17: #{tpu_custom_call.1} parent=15 // pred_check
          %p94 = pneg %p43
        $region18: #{tpu_custom_call.1} parent=15 // pred_check_branch
          %96 = sbr.rel (%p94) target = $region20
        $region19: #{tpu_custom_call.1} parent=15 // pred_region
          %p97 = scmp.lt.s32.totalorder %s23, 1
          %s98 = scalar_select %p97, %s23, 1
          %s99 = smul.addr %s98, 8
          %s100 = scalar_lea.vmem %s2, %s99
        $region20: #{tpu_custom_call.1} parent=15 // pred_fallthru
          _
      $region16: #{tpu_custom_call.1} parent=5 // pred_fallthru
        _
      %p101 = scmp.le.s32.totalorder 1, %s23
      %p102 = scmp.lt.s32.totalorder %s23, 3
      %p103 = pnand %p101, %p102
      %p104 = pneg %p103
      // Predicated region
      $region21: #{tpu_custom_call.1} parent=5 // pred_check
        _
      $region22: #{tpu_custom_call.1} parent=5 // pred_check_branch
        %106 = sbr.rel (%p103) target = $region24
      $region23: #{tpu_custom_call.1} parent=5 // pred_region
        %s107 = ssub.s32 %s23, 1
        %p108 = scmp.lt.s32.totalorder %s28, 1
        %s109 = scalar_select %p108, %s28, 1
        %s110 = smul.addr %s109, 8
        %s111 = scalar_lea.vmem %s2, %s110
        %p112 = pneg %p49
        %p113 = pneg %p46
        %p114 = pneg %p75
        %p115 = pneg %p72
        %s116 = sand.u32 %s62, 1
        %s117 = scalar_lea.sflag [#allocation8], %s116
        %s118 = sand.u32 %s62, 1
        %s119 = smul.addr %s118, 8
        %s120 = scalar_lea.vmem [#allocation7], %s119
        %p121 = scmp.lt.s32.totalorder %s28, 1
        %s122 = scalar_select %p121, %s28, 1
        %s123 = smul.addr %s122, 8
        %s124 = scalar_lea.vmem %s2, %s123
        %p125 = scmp.lt.s32.totalorder %s28, 0
        %s126 = ssub.s32 0, %s28
        %s127 = scalar_select %p125, %s126, %s28
        %s128 = sand.u32 %s127, 1
        %s129 = ssub.s32 0, %s128
        %s130 = scalar_select %p125, %s129, %s128
        %s131 = ssub.s32 1, %s130
        %p132 = scmp.eq.s32.totalorder %s28, 0
        // Predicated region
        $region25: #{tpu_custom_call.1} parent=23 // pred_check
          %p133 = pneg %p132
        $region26: #{tpu_custom_call.1} parent=23 // pred_check_branch
          %135 = sbr.rel (%p133) target = $region28
        $region27: #{tpu_custom_call.1} parent=23 // pred_region
          %s136 = smul.u32 %s28, 128
          %s137 = sld [smem:[#allocation6 + %s136]]
          %p138 = scmp.ne.s32.totalorder %s137, 0
          // Predicated region
          $region29: #{tpu_custom_call.1} parent=27 // pred_check
            %p139 = pneg %p138
          $region30: #{tpu_custom_call.1} parent=27 // pred_check_branch
            %141 = sbr.rel (%p139) target = $region32
          $region31: #{tpu_custom_call.1} parent=27 // pred_region
            %s142 = smul.u32 %s28, 16
            %s143 = sld [smem:[#allocation5 + %s136]]
            %s144 = sadd.s32 %s142, %s143
            %s145 = smul.u32 %s130, 8
            %s146 = smul.addr %s144, 16
            %s147 = scalar_lea.hbm %s3, %s146
            %s148 = scalar_lea.vmem [#allocation2], %s145
            %s149 = scalar_lea.sflag [#allocation3], %s145
            // Predicated region
            $region33: #{tpu_custom_call.1} parent=31 // pred_check
              _
            $region34: #{tpu_custom_call.1} parent=31 // pred_check_branch
              %151 = sbr.rel target = $region36
            $region35: #{tpu_custom_call.1} parent=31 // pred_region
              %152 = sst [smem:[#allocation11]] [#allocation10]
              %153 = sst [smem:[#allocation12]] [#allocation9]
            $region36: #{tpu_custom_call.1} parent=31 // pred_fallthru
              _
            %155 = shalt.err (0)
            %s157 = sshll.u32 %s148, 4
            %s158 = int_to_ptr.vmem [resolvable:$true] %s157
            %160 = dma.hbm_to_vmem [thread:$0]  %s147, 16, %s158, %s149
          $region32: #{tpu_custom_call.1} parent=27 // pred_fallthru
            _
          %s161 = sadd.s32 %s136, 1
          %s162 = sld [smem:[#allocation6 + %s161]]
          %p163 = scmp.ne.s32.totalorder %s162, 0
          // Predicated region
          $region37: #{tpu_custom_call.1} parent=27 // pred_check
            %p164 = pneg %p163
          $region38: #{tpu_custom_call.1} parent=27 // pred_check_branch
            %166 = sbr.rel (%p164) target = $region40
          $region39: #{tpu_custom_call.1} parent=27 // pred_region
            %s167 = smul.u32 %s28, 16
            %s168 = sld [smem:[#allocation5 + %s161]]
            %s169 = sadd.s32 %s167, %s168
            %s170 = smul.u32 %s130, 8
            %s171 = sadd.s32 %s170, 1
            %s172 = smul.addr %s169, 16
            %s173 = scalar_lea.hbm %s3, %s172
            %s174 = scalar_lea.vmem [#allocation2], %s171
            %s175 = scalar_lea.sflag [#allocation3], %s171
            // Predicated region
            $region41: #{tpu_custom_call.1} parent=39 // pred_check
              _
            $region42: #{tpu_custom_call.1} parent=39 // pred_check_branch
              %177 = sbr.rel target = $region44
            $region43: #{tpu_custom_call.1} parent=39 // pred_region
              %178 = sst [smem:[#allocation11]] [#allocation14]
              %179 = sst [smem:[#allocation12]] [#allocation13]
            $region44: #{tpu_custom_call.1} parent=39 // pred_fallthru
              _
            %181 = shalt.err (0)
            %s183 = sshll.u32 %s174, 4
            %s184 = int_to_ptr.vmem [resolvable:$true] %s183
            %186 = dma.hbm_to_vmem [thread:$0]  %s173, 16, %s184, %s175
          $region40: #{tpu_custom_call.1} parent=27 // pred_fallthru
            _
          %s187 = sadd.s32 %s136, 2
          %s188 = sld [smem:[#allocation6 + %s187]]
          %p189 = scmp.ne.s32.totalorder %s188, 0
          // Predicated region
          $region45: #{tpu_custom_call.1} parent=27 // pred_check
            %p190 = pneg %p189
          $region46: #{tpu_custom_call.1} parent=27 // pred_check_branch
            %192 = sbr.rel (%p190) target = $region48
          $region47: #{tpu_custom_call.1} parent=27 // pred_region
            %s193 = smul.u32 %s28, 16
            %s194 = sld [smem:[#allocation5 + %s187]]
            %s195 = sadd.s32 %s193, %s194
            %s196 = smul.u32 %s130, 8
            %s197 = sadd.s32 %s196, 2
            %s198 = smul.addr %s195, 16
            %s199 = scalar_lea.hbm %s3, %s198
            %s200 = scalar_lea.vmem [#allocation2], %s197
            %s201 = scalar_lea.sflag [#allocation3], %s197
            // Predicated region
            $region49: #{tpu_custom_call.1} parent=47 // pred_check
              _
            $region50: #{tpu_custom_call.1} parent=47 // pred_check_branch
              %203 = sbr.rel target = $region52
            $region51: #{tpu_custom_call.1} parent=47 // pred_region
              %204 = sst [smem:[#allocation11]] [#allocation16]
              %205 = sst [smem:[#allocation12]] [#allocation15]
            $region52: #{tpu_custom_call.1} parent=47 // pred_fallthru
              _
            %207 = shalt.err (0)
            %s209 = sshll.u32 %s200, 4
            %s210 = int_to_ptr.vmem [resolvable:$true] %s209
            %212 = dma.hbm_to_vmem [thread:$0]  %s199, 16, %s210, %s201
          $region48: #{tpu_custom_call.1} parent=27 // pred_fallthru
            _
          %s213 = sadd.s32 %s136, 3
          %s214 = sld [smem:[#allocation6 + %s213]]
          %p215 = scmp.ne.s32.totalorder %s214, 0
          // Predicated region
          $region53: #{tpu_custom_call.1} parent=27 // pred_check
            %p216 = pneg %p215
          $region54: #{tpu_custom_call.1} parent=27 // pred_check_branch
            %218 = sbr.rel (%p216) target = $region56
          $region55: #{tpu_custom_call.1} parent=27 // pred_region
            %s219 = smul.u32 %s28, 16
            %s220 = sld [smem:[#allocation5 + %s213]]
            %s221 = sadd.s32 %s219, %s220
            %s222 = smul.u32 %s130, 8
            %s223 = sadd.s32 %s222, 3
            %s224 = smul.addr %s221, 16
            %s225 = scalar_lea.hbm %s3, %s224
            %s226 = scalar_lea.vmem [#allocation2], %s223
            %s227 = scalar_lea.sflag [#allocation3], %s223
            // Predicated region
            $region57: #{tpu_custom_call.1} parent=55 // pred_check
              _
            $region58: #{tpu_custom_call.1} parent=55 // pred_check_branch
              %229 = sbr.rel target = $region60
            $region59: #{tpu_custom_call.1} parent=55 // pred_region
              %230 = sst [smem:[#allocation11]] [#allocation18]
              %231 = sst [smem:[#allocation12]] [#allocation17]
            $region60: #{tpu_custom_call.1} parent=55 // pred_fallthru
              _
            %233 = shalt.err (0)
            %s235 = sshll.u32 %s226, 4
            %s236 = int_to_ptr.vmem [resolvable:$true] %s235
            %238 = dma.hbm_to_vmem [thread:$0]  %s225, 16, %s236, %s227
          $region56: #{tpu_custom_call.1} parent=27 // pred_fallthru
            _
          %s239 = sadd.s32 %s136, 4
          %s240 = sld [smem:[#allocation6 + %s239]]
          %p241 = scmp.ne.s32.totalorder %s240, 0
          // Predicated region
          $region61: #{tpu_custom_call.1} parent=27 // pred_check
            %p242 = pneg %p241
          $region62: #{tpu_custom_call.1} parent=27 // pred_check_branch
            %244 = sbr.rel (%p242) target = $region64
          $region63: #{tpu_custom_call.1} parent=27 // pred_region
            %s245 = smul.u32 %s28, 16
            %s246 = sld [smem:[#allocation5 + %s239]]
            %s247 = sadd.s32 %s245, %s246
            %s248 = smul.u32 %s130, 8
            %s249 = sadd.s32 %s248, 4
            %s250 = smul.addr %s247, 16
            %s251 = scalar_lea.hbm %s3, %s250
            %s252 = scalar_lea.vmem [#allocation2], %s249
            %s253 = scalar_lea.sflag [#allocation3], %s249
            // Predicated region
            $region65: #{tpu_custom_call.1} parent=63 // pred_check
              _
            $region66: #{tpu_custom_call.1} parent=63 // pred_check_branch
              %255 = sbr.rel target = $region68
            $region67: #{tpu_custom_call.1} parent=63 // pred_region
              %256 = sst [smem:[#allocation11]] [#allocation20]
              %257 = sst [smem:[#allocation12]] [#allocation19]
            $region68: #{tpu_custom_call.1} parent=63 // pred_fallthru
              _
            %259 = shalt.err (0)
            %s261 = sshll.u32 %s252, 4
            %s262 = int_to_ptr.vmem [resolvable:$true] %s261
            %264 = dma.hbm_to_vmem [thread:$0]  %s251, 16, %s262, %s253
          $region64: #{tpu_custom_call.1} parent=27 // pred_fallthru
            _
          %s265 = sadd.s32 %s136, 5
          %s266 = sld [smem:[#allocation6 + %s265]]
          %p267 = scmp.ne.s32.totalorder %s266, 0
          // Predicated region
          $region69: #{tpu_custom_call.1} parent=27 // pred_check
            %p268 = pneg %p267
          $region70: #{tpu_custom_call.1} parent=27 // pred_check_branch
            %270 = sbr.rel (%p268) target = $region72
          $region71: #{tpu_custom_call.1} parent=27 // pred_region
            %s271 = smul.u32 %s28, 16
            %s272 = sld [smem:[#allocation5 + %s265]]
            %s273 = sadd.s32 %s271, %s272
            %s274 = smul.u32 %s130, 8
            %s275 = sadd.s32 %s274, 5
            %s276 = smul.addr %s273, 16
            %s277 = scalar_lea.hbm %s3, %s276
            %s278 = scalar_lea.vmem [#allocation2], %s275
            %s279 = scalar_lea.sflag [#allocation3], %s275
            // Predicated region
            $region73: #{tpu_custom_call.1} parent=71 // pred_check
              _
            $region74: #{tpu_custom_call.1} parent=71 // pred_check_branch
              %281 = sbr.rel target = $region76
            $region75: #{tpu_custom_call.1} parent=71 // pred_region
              %282 = sst [smem:[#allocation11]] [#allocation22]
              %283 = sst [smem:[#allocation12]] [#allocation21]
            $region76: #{tpu_custom_call.1} parent=71 // pred_fallthru
              _
            %285 = shalt.err (0)
            %s287 = sshll.u32 %s278, 4
            %s288 = int_to_ptr.vmem [resolvable:$true] %s287
            %290 = dma.hbm_to_vmem [thread:$0]  %s277, 16, %s288, %s279
          $region72: #{tpu_custom_call.1} parent=27 // pred_fallthru
            _
          %s291 = sadd.s32 %s136, 6
          %s292 = sld [smem:[#allocation6 + %s291]]
          %p293 = scmp.ne.s32.totalorder %s292, 0
          // Predicated region
          $region77: #{tpu_custom_call.1} parent=27 // pred_check
            %p294 = pneg %p293
          $region78: #{tpu_custom_call.1} parent=27 // pred_check_branch
            %296 = sbr.rel (%p294) target = $region80
          $region79: #{tpu_custom_call.1} parent=27 // pred_region
            %s297 = smul.u32 %s28, 16
            %s298 = sld [smem:[#allocation5 + %s291]]
            %s299 = sadd.s32 %s297, %s298
            %s300 = smul.u32 %s130, 8
            %s301 = sadd.s32 %s300, 6
            %s302 = smul.addr %s299, 16
            %s303 = scalar_lea.hbm %s3, %s302
            %s304 = scalar_lea.vmem [#allocation2], %s301
            %s305 = scalar_lea.sflag [#allocation3], %s301
            // Predicated region
            $region81: #{tpu_custom_call.1} parent=79 // pred_check
              _
            $region82: #{tpu_custom_call.1} parent=79 // pred_check_branch
              %307 = sbr.rel target = $region84
            $region83: #{tpu_custom_call.1} parent=79 // pred_region
              %308 = sst [smem:[#allocation11]] [#allocation24]
              %309 = sst [smem:[#allocation12]] [#allocation23]
            $region84: #{tpu_custom_call.1} parent=79 // pred_fallthru
              _
            %311 = shalt.err (0)
            %s313 = sshll.u32 %s304, 4
            %s314 = int_to_ptr.vmem [resolvable:$true] %s313
            %316 = dma.hbm_to_vmem [thread:$0]  %s303, 16, %s314, %s305
          $region80: #{tpu_custom_call.1} parent=27 // pred_fallthru
            _
          %s317 = sadd.s32 %s136, 7
          %s318 = sld [smem:[#allocation6 + %s317]]
          %p319 = scmp.ne.s32.totalorder %s318, 0
          // Predicated region
          $region85: #{tpu_custom_call.1} parent=27 // pred_check
            %p320 = pneg %p319
          $region86: #{tpu_custom_call.1} parent=27 // pred_check_branch
            %322 = sbr.rel (%p320) target = $region88
          $region87: #{tpu_custom_call.1} parent=27 // pred_region
            %s323 = smul.u32 %s28, 16
            %s324 = sld [smem:[#allocation5 + %s317]]
            %s325 = sadd.s32 %s323, %s324
            %s326 = smul.u32 %s130, 8
            %s327 = sadd.s32 %s326, 7
            %s328 = smul.addr %s325, 16
            %s329 = scalar_lea.hbm %s3, %s328
            %s330 = scalar_lea.vmem [#allocation2], %s327
            %s331 = scalar_lea.sflag [#allocation3], %s327
            // Predicated region
            $region89: #{tpu_custom_call.1} parent=87 // pred_check
              _
            $region90: #{tpu_custom_call.1} parent=87 // pred_check_branch
              %333 = sbr.rel target = $region92
            $region91: #{tpu_custom_call.1} parent=87 // pred_region
              %334 = sst [smem:[#allocation11]] [#allocation26]
              %335 = sst [smem:[#allocation12]] [#allocation25]
            $region92: #{tpu_custom_call.1} parent=87 // pred_fallthru
              _
            %337 = shalt.err (0)
            %s339 = sshll.u32 %s330, 4
            %s340 = int_to_ptr.vmem [resolvable:$true] %s339
            %342 = dma.hbm_to_vmem [thread:$0]  %s329, 16, %s340, %s331
          $region88: #{tpu_custom_call.1} parent=27 // pred_fallthru
            _
        $region28: #{tpu_custom_call.1} parent=23 // pred_fallthru
          _
        %s343 = sadd.s32 %s28, 1
        %p344 = scmp.lt.s32.totalorder %s343, 2
        // Predicated region
        $region93: #{tpu_custom_call.1} parent=23 // pred_check
          %p345 = pneg %p344
        $region94: #{tpu_custom_call.1} parent=23 // pred_check_branch
          %347 = sbr.rel (%p345) target = $region96
        $region95: #{tpu_custom_call.1} parent=23 // pred_region
          %s348 = smul.u32 %s343, 128
          %s349 = sld [smem:[#allocation6 + %s348]]
          %p350 = scmp.ne.s32.totalorder %s349, 0
          // Predicated region
          $region97: #{tpu_custom_call.1} parent=95 // pred_check
            %p351 = pneg %p350
          $region98: #{tpu_custom_call.1} parent=95 // pred_check_branch
            %353 = sbr.rel (%p351) target = $region100
          $region99: #{tpu_custom_call.1} parent=95 // pred_region
            %s354 = smul.u32 %s343, 16
            %s355 = sld [smem:[#allocation5 + %s348]]
            %s356 = sadd.s32 %s354, %s355
            %s357 = smul.u32 %s131, 8
            %s358 = smul.addr %s356, 16
            %s359 = scalar_lea.hbm %s3, %s358
            %s360 = scalar_lea.vmem [#allocation2], %s357
            %s361 = scalar_lea.sflag [#allocation3], %s357
            // Predicated region
            $region101: #{tpu_custom_call.1} parent=99 // pred_check
              _
            $region102: #{tpu_custom_call.1} parent=99 // pred_check_branch
              %363 = sbr.rel target = $region104
            $region103: #{tpu_custom_call.1} parent=99 // pred_region
              %364 = sst [smem:[#allocation11]] [#allocation28]
              %365 = sst [smem:[#allocation12]] [#allocation27]
            $region104: #{tpu_custom_call.1} parent=99 // pred_fallthru
              _
            %367 = shalt.err (0)
            %s369 = sshll.u32 %s360, 4
            %s370 = int_to_ptr.vmem [resolvable:$true] %s369
            %372 = dma.hbm_to_vmem [thread:$0]  %s359, 16, %s370, %s361
          $region100: #{tpu_custom_call.1} parent=95 // pred_fallthru
            _
          %s373 = sadd.s32 %s348, 1
          %s374 = sld [smem:[#allocation6 + %s373]]
          %p375 = scmp.ne.s32.totalorder %s374, 0
          // Predicated region
          $region105: #{tpu_custom_call.1} parent=95 // pred_check
            %p376 = pneg %p375
          $region106: #{tpu_custom_call.1} parent=95 // pred_check_branch
            %378 = sbr.rel (%p376) target = $region108
          $region107: #{tpu_custom_call.1} parent=95 // pred_region
            %s379 = smul.u32 %s343, 16
            %s380 = sld [smem:[#allocation5 + %s373]]
            %s381 = sadd.s32 %s379, %s380
            %s382 = smul.u32 %s131, 8
            %s383 = sadd.s32 %s382, 1
            %s384 = smul.addr %s381, 16
            %s385 = scalar_lea.hbm %s3, %s384
            %s386 = scalar_lea.vmem [#allocation2], %s383
            %s387 = scalar_lea.sflag [#allocation3], %s383
            // Predicated region
            $region109: #{tpu_custom_call.1} parent=107 // pred_check
              _
            $region110: #{tpu_custom_call.1} parent=107 // pred_check_branch
              %389 = sbr.rel target = $region112
            $region111: #{tpu_custom_call.1} parent=107 // pred_region
              %390 = sst [smem:[#allocation11]] [#allocation30]
              %391 = sst [smem:[#allocation12]] [#allocation29]
            $region112: #{tpu_custom_call.1} parent=107 // pred_fallthru
              _
            %393 = shalt.err (0)
            %s395 = sshll.u32 %s386, 4
            %s396 = int_to_ptr.vmem [resolvable:$true] %s395
            %398 = dma.hbm_to_vmem [thread:$0]  %s385, 16, %s396, %s387
          $region108: #{tpu_custom_call.1} parent=95 // pred_fallthru
            _
          %s399 = sadd.s32 %s348, 2
          %s400 = sld [smem:[#allocation6 + %s399]]
          %p401 = scmp.ne.s32.totalorder %s400, 0
          // Predicated region
          $region113: #{tpu_custom_call.1} parent=95 // pred_check
            %p402 = pneg %p401
          $region114: #{tpu_custom_call.1} parent=95 // pred_check_branch
            %404 = sbr.rel (%p402) target = $region116
          $region115: #{tpu_custom_call.1} parent=95 // pred_region
            %s405 = smul.u32 %s343, 16
            %s406 = sld [smem:[#allocation5 + %s399]]
            %s407 = sadd.s32 %s405, %s406
            %s408 = smul.u32 %s131, 8
            %s409 = sadd.s32 %s408, 2
            %s410 = smul.addr %s407, 16
            %s411 = scalar_lea.hbm %s3, %s410
            %s412 = scalar_lea.vmem [#allocation2], %s409
            %s413 = scalar_lea.sflag [#allocation3], %s409
            // Predicated region
            $region117: #{tpu_custom_call.1} parent=115 // pred_check
              _
            $region118: #{tpu_custom_call.1} parent=115 // pred_check_branch
              %415 = sbr.rel target = $region120
            $region119: #{tpu_custom_call.1} parent=115 // pred_region
              %416 = sst [smem:[#allocation11]] [#allocation32]
              %417 = sst [smem:[#allocation12]] [#allocation31]
            $region120: #{tpu_custom_call.1} parent=115 // pred_fallthru
              _
            %419 = shalt.err (0)
            %s421 = sshll.u32 %s412, 4
            %s422 = int_to_ptr.vmem [resolvable:$true] %s421
            %424 = dma.hbm_to_vmem [thread:$0]  %s411, 16, %s422, %s413
          $region116: #{tpu_custom_call.1} parent=95 // pred_fallthru
            _
          %s425 = sadd.s32 %s348, 3
          %s426 = sld [smem:[#allocation6 + %s425]]
          %p427 = scmp.ne.s32.totalorder %s426, 0
          // Predicated region
          $region121: #{tpu_custom_call.1} parent=95 // pred_check
            %p428 = pneg %p427
          $region122: #{tpu_custom_call.1} parent=95 // pred_check_branch
            %430 = sbr.rel (%p428) target = $region124
          $region123: #{tpu_custom_call.1} parent=95 // pred_region
            %s431 = smul.u32 %s343, 16
            %s432 = sld [smem:[#allocation5 + %s425]]
            %s433 = sadd.s32 %s431, %s432
            %s434 = smul.u32 %s131, 8
            %s435 = sadd.s32 %s434, 3
            %s436 = smul.addr %s433, 16
            %s437 = scalar_lea.hbm %s3, %s436
            %s438 = scalar_lea.vmem [#allocation2], %s435
            %s439 = scalar_lea.sflag [#allocation3], %s435
            // Predicated region
            $region125: #{tpu_custom_call.1} parent=123 // pred_check
              _
            $region126: #{tpu_custom_call.1} parent=123 // pred_check_branch
              %441 = sbr.rel target = $region128
            $region127: #{tpu_custom_call.1} parent=123 // pred_region
              %442 = sst [smem:[#allocation11]] [#allocation34]
              %443 = sst [smem:[#allocation12]] [#allocation33]
            $region128: #{tpu_custom_call.1} parent=123 // pred_fallthru
              _
            %445 = shalt.err (0)
            %s447 = sshll.u32 %s438, 4
            %s448 = int_to_ptr.vmem [resolvable:$true] %s447
            %450 = dma.hbm_to_vmem [thread:$0]  %s437, 16, %s448, %s439
          $region124: #{tpu_custom_call.1} parent=95 // pred_fallthru
            _
          %s451 = sadd.s32 %s348, 4
          %s452 = sld [smem:[#allocation6 + %s451]]
          %p453 = scmp.ne.s32.totalorder %s452, 0
          // Predicated region
          $region129: #{tpu_custom_call.1} parent=95 // pred_check
            %p454 = pneg %p453
          $region130: #{tpu_custom_call.1} parent=95 // pred_check_branch
            %456 = sbr.rel (%p454) target = $region132
          $region131: #{tpu_custom_call.1} parent=95 // pred_region
            %s457 = smul.u32 %s343, 16
            %s458 = sld [smem:[#allocation5 + %s451]]
            %s459 = sadd.s32 %s457, %s458
            %s460 = smul.u32 %s131, 8
            %s461 = sadd.s32 %s460, 4
            %s462 = smul.addr %s459, 16
            %s463 = scalar_lea.hbm %s3, %s462
            %s464 = scalar_lea.vmem [#allocation2], %s461
            %s465 = scalar_lea.sflag [#allocation3], %s461
            // Predicated region
            $region133: #{tpu_custom_call.1} parent=131 // pred_check
              _
            $region134: #{tpu_custom_call.1} parent=131 // pred_check_branch
              %467 = sbr.rel target = $region136
            $region135: #{tpu_custom_call.1} parent=131 // pred_region
              %468 = sst [smem:[#allocation11]] [#allocation36]
              %469 = sst [smem:[#allocation12]] [#allocation35]
            $region136: #{tpu_custom_call.1} parent=131 // pred_fallthru
              _
            %471 = shalt.err (0)
            %s473 = sshll.u32 %s464, 4
            %s474 = int_to_ptr.vmem [resolvable:$true] %s473
            %476 = dma.hbm_to_vmem [thread:$0]  %s463, 16, %s474, %s465
          $region132: #{tpu_custom_call.1} parent=95 // pred_fallthru
            _
          %s477 = sadd.s32 %s348, 5
          %s478 = sld [smem:[#allocation6 + %s477]]
          %p479 = scmp.ne.s32.totalorder %s478, 0
          // Predicated region
          $region137: #{tpu_custom_call.1} parent=95 // pred_check
            %p480 = pneg %p479
          $region138: #{tpu_custom_call.1} parent=95 // pred_check_branch
            %482 = sbr.rel (%p480) target = $region140
          $region139: #{tpu_custom_call.1} parent=95 // pred_region
            %s483 = smul.u32 %s343, 16
            %s484 = sld [smem:[#allocation5 + %s477]]
            %s485 = sadd.s32 %s483, %s484
            %s486 = smul.u32 %s131, 8
            %s487 = sadd.s32 %s486, 5
            %s488 = smul.addr %s485, 16
            %s489 = scalar_lea.hbm %s3, %s488
            %s490 = scalar_lea.vmem [#allocation2], %s487
            %s491 = scalar_lea.sflag [#allocation3], %s487
            // Predicated region
            $region141: #{tpu_custom_call.1} parent=139 // pred_check
              _
            $region142: #{tpu_custom_call.1} parent=139 // pred_check_branch
              %493 = sbr.rel target = $region144
            $region143: #{tpu_custom_call.1} parent=139 // pred_region
              %494 = sst [smem:[#allocation11]] [#allocation38]
              %495 = sst [smem:[#allocation12]] [#allocation37]
            $region144: #{tpu_custom_call.1} parent=139 // pred_fallthru
              _
            %497 = shalt.err (0)
            %s499 = sshll.u32 %s490, 4
            %s500 = int_to_ptr.vmem [resolvable:$true] %s499
            %502 = dma.hbm_to_vmem [thread:$0]  %s489, 16, %s500, %s491
          $region140: #{tpu_custom_call.1} parent=95 // pred_fallthru
            _
          %s503 = sadd.s32 %s348, 6
          %s504 = sld [smem:[#allocation6 + %s503]]
          %p505 = scmp.ne.s32.totalorder %s504, 0
          // Predicated region
          $region145: #{tpu_custom_call.1} parent=95 // pred_check
            %p506 = pneg %p505
          $region146: #{tpu_custom_call.1} parent=95 // pred_check_branch
            %508 = sbr.rel (%p506) target = $region148
          $region147: #{tpu_custom_call.1} parent=95 // pred_region
            %s509 = smul.u32 %s343, 16
            %s510 = sld [smem:[#allocation5 + %s503]]
            %s511 = sadd.s32 %s509, %s510
            %s512 = smul.u32 %s131, 8
            %s513 = sadd.s32 %s512, 6
            %s514 = smul.addr %s511, 16
            %s515 = scalar_lea.hbm %s3, %s514
            %s516 = scalar_lea.vmem [#allocation2], %s513
            %s517 = scalar_lea.sflag [#allocation3], %s513
            // Predicated region
            $region149: #{tpu_custom_call.1} parent=147 // pred_check
              _
            $region150: #{tpu_custom_call.1} parent=147 // pred_check_branch
              %519 = sbr.rel target = $region152
            $region151: #{tpu_custom_call.1} parent=147 // pred_region
              %520 = sst [smem:[#allocation11]] [#allocation40]
              %521 = sst [smem:[#allocation12]] [#allocation39]
            $region152: #{tpu_custom_call.1} parent=147 // pred_fallthru
              _
            %523 = shalt.err (0)
            %s525 = sshll.u32 %s516, 4
            %s526 = int_to_ptr.vmem [resolvable:$true] %s525
            %528 = dma.hbm_to_vmem [thread:$0]  %s515, 16, %s526, %s517
          $region148: #{tpu_custom_call.1} parent=95 // pred_fallthru
            _
          %s529 = sadd.s32 %s348, 7
          %s530 = sld [smem:[#allocation6 + %s529]]
          %p531 = scmp.ne.s32.totalorder %s530, 0
          // Predicated region
          $region153: #{tpu_custom_call.1} parent=95 // pred_check
            %p532 = pneg %p531
          $region154: #{tpu_custom_call.1} parent=95 // pred_check_branch
            %534 = sbr.rel (%p532) target = $region156
          $region155: #{tpu_custom_call.1} parent=95 // pred_region
            %s535 = smul.u32 %s343, 16
            %s536 = sld [smem:[#allocation5 + %s529]]
            %s537 = sadd.s32 %s535, %s536
            %s538 = smul.u32 %s131, 8
            %s539 = sadd.s32 %s538, 7
            %s540 = smul.addr %s537, 16
            %s541 = scalar_lea.hbm %s3, %s540
            %s542 = scalar_lea.vmem [#allocation2], %s539
            %s543 = scalar_lea.sflag [#allocation3], %s539
            // Predicated region
            $region157: #{tpu_custom_call.1} parent=155 // pred_check
              _
            $region158: #{tpu_custom_call.1} parent=155 // pred_check_branch
              %545 = sbr.rel target = $region160
            $region159: #{tpu_custom_call.1} parent=155 // pred_region
              %546 = sst [smem:[#allocation11]] [#allocation42]
              %547 = sst [smem:[#allocation12]] [#allocation41]
            $region160: #{tpu_custom_call.1} parent=155 // pred_fallthru
              _
            %549 = shalt.err (0)
            %s551 = sshll.u32 %s542, 4
            %s552 = int_to_ptr.vmem [resolvable:$true] %s551
            %554 = dma.hbm_to_vmem [thread:$0]  %s541, 16, %s552, %s543
          $region156: #{tpu_custom_call.1} parent=95 // pred_fallthru
            _
        $region96: #{tpu_custom_call.1} parent=23 // pred_fallthru
          _
        %s555 = smul.u32 %s28, 128
        %s556 = sld [smem:[#allocation6 + %s555]]
        %p557 = scmp.ne.s32.totalorder %s556, 0
        // Predicated region
        $region161: #{tpu_custom_call.1} parent=23 // pred_check
          %p558 = pneg %p557
        $region162: #{tpu_custom_call.1} parent=23 // pred_check_branch
          %560 = sbr.rel (%p558) target = $region164
        $region163: #{tpu_custom_call.1} parent=23 // pred_region
          %s561 = smul.u32 %s130, 8
          %s562 = scalar_lea.sflag [#allocation3], %s561
          %s563 = smul.u32 1, 1
          %s564 = sshll.u32 %s563, 4
          %565 = dma.done %s562, %s564
        $region164: #{tpu_custom_call.1} parent=23 // pred_fallthru
          _
        %s566 = sadd.s32 %s555, 1
        %s567 = sld [smem:[#allocation6 + %s566]]
        %p568 = scmp.ne.s32.totalorder %s567, 0
        // Predicated region
        $region165: #{tpu_custom_call.1} parent=23 // pred_check
          %p569 = pneg %p568
        $region166: #{tpu_custom_call.1} parent=23 // pred_check_branch
          %571 = sbr.rel (%p569) target = $region168
        $region167: #{tpu_custom_call.1} parent=23 // pred_region
          %s572 = smul.u32 %s130, 8
          %s573 = sadd.s32 %s572, 1
          %s574 = scalar_lea.sflag [#allocation3], %s573
          %s575 = smul.u32 1, 1
          %s576 = sshll.u32 %s575, 4
          %577 = dma.done %s574, %s576
        $region168: #{tpu_custom_call.1} parent=23 // pred_fallthru
          _
        %s578 = sadd.s32 %s555, 2
        %s579 = sld [smem:[#allocation6 + %s578]]
        %p580 = scmp.ne.s32.totalorder %s579, 0
        // Predicated region
        $region169: #{tpu_custom_call.1} parent=23 // pred_check
          %p581 = pneg %p580
        $region170: #{tpu_custom_call.1} parent=23 // pred_check_branch
          %583 = sbr.rel (%p581) target = $region172
        $region171: #{tpu_custom_call.1} parent=23 // pred_region
          %s584 = smul.u32 %s130, 8
          %s585 = sadd.s32 %s584, 2
          %s586 = scalar_lea.sflag [#allocation3], %s585
          %s587 = smul.u32 1, 1
          %s588 = sshll.u32 %s587, 4
          %589 = dma.done %s586, %s588
        $region172: #{tpu_custom_call.1} parent=23 // pred_fallthru
          _
        %s590 = sadd.s32 %s555, 3
        %s591 = sld [smem:[#allocation6 + %s590]]
        %p592 = scmp.ne.s32.totalorder %s591, 0
        // Predicated region
        $region173: #{tpu_custom_call.1} parent=23 // pred_check
          %p593 = pneg %p592
        $region174: #{tpu_custom_call.1} parent=23 // pred_check_branch
          %595 = sbr.rel (%p593) target = $region176
        $region175: #{tpu_custom_call.1} parent=23 // pred_region
          %s596 = smul.u32 %s130, 8
          %s597 = sadd.s32 %s596, 3
          %s598 = scalar_lea.sflag [#allocation3], %s597
          %s599 = smul.u32 1, 1
          %s600 = sshll.u32 %s599, 4
          %601 = dma.done %s598, %s600
        $region176: #{tpu_custom_call.1} parent=23 // pred_fallthru
          _
        %s602 = sadd.s32 %s555, 4
        %s603 = sld [smem:[#allocation6 + %s602]]
        %p604 = scmp.ne.s32.totalorder %s603, 0
        // Predicated region
        $region177: #{tpu_custom_call.1} parent=23 // pred_check
          %p605 = pneg %p604
        $region178: #{tpu_custom_call.1} parent=23 // pred_check_branch
          %607 = sbr.rel (%p605) target = $region180
        $region179: #{tpu_custom_call.1} parent=23 // pred_region
          %s608 = smul.u32 %s130, 8
          %s609 = sadd.s32 %s608, 4
          %s610 = scalar_lea.sflag [#allocation3], %s609
          %s611 = smul.u32 1, 1
          %s612 = sshll.u32 %s611, 4
          %613 = dma.done %s610, %s612
        $region180: #{tpu_custom_call.1} parent=23 // pred_fallthru
          _
        %s614 = sadd.s32 %s555, 5
        %s615 = sld [smem:[#allocation6 + %s614]]
        %p616 = scmp.ne.s32.totalorder %s615, 0
        // Predicated region
        $region181: #{tpu_custom_call.1} parent=23 // pred_check
          %p617 = pneg %p616
        $region182: #{tpu_custom_call.1} parent=23 // pred_check_branch
          %619 = sbr.rel (%p617) target = $region184
        $region183: #{tpu_custom_call.1} parent=23 // pred_region
          %s620 = smul.u32 %s130, 8
          %s621 = sadd.s32 %s620, 5
          %s622 = scalar_lea.sflag [#allocation3], %s621
          %s623 = smul.u32 1, 1
          %s624 = sshll.u32 %s623, 4
          %625 = dma.done %s622, %s624
        $region184: #{tpu_custom_call.1} parent=23 // pred_fallthru
          _
        %s626 = sadd.s32 %s555, 6
        %s627 = sld [smem:[#allocation6 + %s626]]
        %p628 = scmp.ne.s32.totalorder %s627, 0
        // Predicated region
        $region185: #{tpu_custom_call.1} parent=23 // pred_check
          %p629 = pneg %p628
        $region186: #{tpu_custom_call.1} parent=23 // pred_check_branch
          %631 = sbr.rel (%p629) target = $region188
        $region187: #{tpu_custom_call.1} parent=23 // pred_region
          %s632 = smul.u32 %s130, 8
          %s633 = sadd.s32 %s632, 6
          %s634 = scalar_lea.sflag [#allocation3], %s633
          %s635 = smul.u32 1, 1
          %s636 = sshll.u32 %s635, 4
          %637 = dma.done %s634, %s636
        $region188: #{tpu_custom_call.1} parent=23 // pred_fallthru
          _
        %s638 = sadd.s32 %s555, 7
        %s639 = sld [smem:[#allocation6 + %s638]]
        %p640 = scmp.ne.s32.totalorder %s639, 0
        // Predicated region
        $region189: #{tpu_custom_call.1} parent=23 // pred_check
          %p641 = pneg %p640
        $region190: #{tpu_custom_call.1} parent=23 // pred_check_branch
          %643 = sbr.rel (%p641) target = $region192
        $region191: #{tpu_custom_call.1} parent=23 // pred_region
          %s644 = smul.u32 %s130, 8
          %s645 = sadd.s32 %s644, 7
          %s646 = scalar_lea.sflag [#allocation3], %s645
          %s647 = smul.u32 1, 1
          %s648 = sshll.u32 %s647, 4
          %649 = dma.done %s646, %s648
        $region192: #{tpu_custom_call.1} parent=23 // pred_fallthru
          _
        %s650 = smul.u32 %s130, 8
        %s651 = scalar_lea.vmem [#allocation2], %s650
        %v652 = vld [vmem:[%s651] sm:$0xff]
        %v653 = vld [vmem:[%s124] sm:$0xff]
        %vm654 = vcmp.ne.f32.partialorder %v653, 0.0
        %v655 = vsel %vm654, 1, 0
        %656 = vset.pattern.permute.xlu0 0
        %657 = vperm.xlu0 %656, %v655
        %v658 = vpop.permute.xlu0 %657
        %vm659 = vcmp.eq.s32.totalorder %v658, 1
        %v660 = vsel %vm659, %v652, 0.0
        %661 = vst [vmem:[%s120] sm:$0xff] %v660
        %s662 = sand.u32 %s62, 1
        %s663 = scalar_lea.sflag [#allocation8], %s662
        %s664 = sand.u32 %s62, 1
        %s665 = smul.addr %s664, 8
        %s666 = scalar_lea.vmem [#allocation7], %s665
        // Predicated region
        $region193: #{tpu_custom_call.1} parent=23 // pred_check
          %p667 = pneg %p72
        $region194: #{tpu_custom_call.1} parent=23 // pred_check_branch
          %669 = sbr.rel (%p667) target = $region196
        $region195: #{tpu_custom_call.1} parent=23 // pred_region
          %s671 = ssub.s32 128, 128
          %672 = vsyncadd %s663, %s671
          %s673 = smul.addr %s28, 128
          %s674 = scalar_lea.hbm %s4, %s673
          %s676 = sshll.u32 %s666, 4
          %s677 = int_to_ptr.vmem [resolvable:$true] %s676
          %679 = dma.vmem_to_hbm [thread:$0]  %s677, 128, %s674, %s663
        $region196: #{tpu_custom_call.1} parent=23 // pred_fallthru
          _
      $region24: #{tpu_custom_call.1} parent=5 // pred_fallthru
        _
      %p680 = scmp.le.s32.totalorder 2, %s23
      // Predicated region
      $region197: #{tpu_custom_call.1} parent=5 // pred_check
        %p681 = pneg %p680
      $region198: #{tpu_custom_call.1} parent=5 // pred_check_branch
        %683 = sbr.rel (%p681) target = $region200
      $region199: #{tpu_custom_call.1} parent=5 // pred_region
        %s684 = ssub.s32 %s23, 2
        // Predicated region
        $region201: #{tpu_custom_call.1} parent=199 // pred_check
          %p685 = pneg %p78
        $region202: #{tpu_custom_call.1} parent=199 // pred_check_branch
          %687 = sbr.rel (%p685) target = $region204
        $region203: #{tpu_custom_call.1} parent=199 // pred_region
          %s688 = sand.u32 %s63, 1
          %s689 = scalar_lea.sflag [#allocation8], %s688
          %s690 = sand.u32 %s63, 1
          %s691 = smul.addr %s690, 8
          %s692 = scalar_lea.vmem [#allocation7], %s691
          %693 = dma.done %s689, 128
        $region204: #{tpu_custom_call.1} parent=199 // pred_fallthru
          _
      $region200: #{tpu_custom_call.1} parent=5 // pred_fallthru
        _
    $region6: #{tpu_custom_call.1} parent=1 // loop_footer
      %s27 = sadd.s32 1, %s23
    $region7: #{tpu_custom_call.1} parent=1 // loop_footer_branch
      %22 = sbr.rel target = $region3
    $region8: #{tpu_custom_call.1} parent=1 // loop_exit
      _
    %694 = vsyncpa [#allocation8], 1
    %s695 = scalar_lea.sflag [#allocation8], 1
    %696 = vsyncpa %s695, 1
  %697 = vsyncmov [#allocation3]
  %s698 = vpop.sfrf %697
  %p699 = scmp.eq.s32.totalorder %s698, 0
  %p700 = pneg %p699
  %702 = shalt.err (%p700)
  %s703 = scalar_lea.sflag [#allocation3], 1
  %704 = vsyncmov %s703
  %s705 = vpop.sfrf %704
  %p706 = scmp.eq.s32.totalorder %s705, 0
  %p707 = pneg %p706
  %709 = shalt.err (%p707)
  %s710 = scalar_lea.sflag [#allocation3], 2
  %711 = vsyncmov %s710
  %s712 = vpop.sfrf %711
  %p713 = scmp.eq.s32.totalorder %s712, 0
  %p714 = pneg %p713
  %716 = shalt.err (%p714)
  %s717 = scalar_lea.sflag [#allocation3], 3
  %718 = vsyncmov %s717
  %s719 = vpop.sfrf %718
  %p720 = scmp.eq.s32.totalorder %s719, 0
  %p721 = pneg %p720
  %723 = shalt.err (%p721)
  %s724 = scalar_lea.sflag [#allocation3], 4
  %725 = vsyncmov %s724
  %s726 = vpop.sfrf %725
  %p727 = scmp.eq.s32.totalorder %s726, 0
  %p728 = pneg %p727
  %730 = shalt.err (%p728)
  %s731 = scalar_lea.sflag [#allocation3], 5
  %732 = vsyncmov %s731
  %s733 = vpop.sfrf %732
  %p734 = scmp.eq.s32.totalorder %s733, 0
  %p735 = pneg %p734
  %737 = shalt.err (%p735)
  %s738 = scalar_lea.sflag [#allocation3], 6
  %739 = vsyncmov %s738
  %s740 = vpop.sfrf %739
  %p741 = scmp.eq.s32.totalorder %s740, 0
  %p742 = pneg %p741
  %744 = shalt.err (%p742)
  %s745 = scalar_lea.sflag [#allocation3], 7
  %746 = vsyncmov %s745
  %s747 = vpop.sfrf %746
  %p748 = scmp.eq.s32.totalorder %s747, 0
  %p749 = pneg %p748
  %751 = shalt.err (%p749)
  %s752 = scalar_lea.sflag [#allocation3], 8
  %753 = vsyncmov %s752
  %s754 = vpop.sfrf %753
  %p755 = scmp.eq.s32.totalorder %s754, 0
  %p756 = pneg %p755
  %758 = shalt.err (%p756)
  %s759 = scalar_lea.sflag [#allocation3], 9
  %760 = vsyncmov %s759
  %s761 = vpop.sfrf %760
  %p762 = scmp.eq.s32.totalorder %s761, 0
  %p763 = pneg %p762
  %765 = shalt.err (%p763)
  %s766 = scalar_lea.sflag [#allocation3], 10
  %767 = vsyncmov %s766
  %s768 = vpop.sfrf %767
  %p769 = scmp.eq.s32.totalorder %s768, 0
  %p770 = pneg %p769
  %772 = shalt.err (%p770)
  %s773 = scalar_lea.sflag [#allocation3], 11
  %774 = vsyncmov %s773
  %s775 = vpop.sfrf %774
  %p776 = scmp.eq.s32.totalorder %s775, 0
  %p777 = pneg %p776
  %779 = shalt.err (%p777)
  %s780 = scalar_lea.sflag [#allocation3], 12
  %781 = vsyncmov %s780
  %s782 = vpop.sfrf %781
  %p783 = scmp.eq.s32.totalorder %s782, 0
  %p784 = pneg %p783
  %786 = shalt.err (%p784)
  %s787 = scalar_lea.sflag [#allocation3], 13
  %788 = vsyncmov %s787
  %s789 = vpop.sfrf %788
  %p790 = scmp.eq.s32.totalorder %s789, 0
  %p791 = pneg %p790
  %793 = shalt.err (%p791)
  %s794 = scalar_lea.sflag [#allocation3], 14
  %795 = vsyncmov %s794
  %s796 = vpop.sfrf %795
  %p797 = scmp.eq.s32.totalorder %s796, 0
  %p798 = pneg %p797
  %800 = shalt.err (%p798)
  %s801 = scalar_lea.sflag [#allocation3], 15
  %802 = vsyncmov %s801
  %s803 = vpop.sfrf %802
  %p804 = scmp.eq.s32.totalorder %s803, 0
  %p805 = pneg %p804
  %807 = shalt.err (%p805)

</llo_original>
